<compile_context>
chip_gen: v6e
topology: v6e:2x2x1
jax: 0.10.0
libtpu: 0.0.40
codegen_flags: <defaults>
</compile_context>

<pallas_src>
import jax
import jax.numpy as jnp
from jax.experimental import pallas as pl
from jax.experimental.pallas import tpu as pltpu

HIDDEN = 50        # matches nn.Linear(1, 50)
CHUNK_ROWS = 8     # sublane granule processed per inner-loop iteration
LANE = 128
MAX_ROWS = 64      # max batch-block rows  -> block up to (64, 1024) elements
MAX_LANES = 1024   # max batch-block lanes


def mlp_kernel(x_ref, w1_ref, b1_ref, w2_ref, b2_ref, o_ref):
    """One (BR, L) batch tile of  relu(x*w1 + b1) . w2 + b2  on the VPU.

    w1/b1/w2/b2 are SMEM scalars; the hidden axis is streamed (accumulated)
    so only the x chunk, the accumulator and one temp stay vector-live.
    """
    rows, _ = x_ref.shape
    nh = w1_ref.shape[0]
    b2 = b2_ref[0]

    @pl.loop(0, rows // CHUNK_ROWS)
    def _(c):
        r0 = pl.multiple_of(c * CHUNK_ROWS, CHUNK_ROWS)
        x = x_ref[pl.ds(r0, CHUNK_ROWS), :]                 # (8, L) f32
        acc = jnp.zeros_like(x) + b2
        for j in range(nh):                                  # unrolled: 50 hidden units
            acc = acc + jnp.maximum(x * w1_ref[j] + b1_ref[j], 0.0) * w2_ref[j]
        o_ref[pl.ds(r0, CHUNK_ROWS), :] = acc.astype(o_ref.dtype)


def _choose_block(n):
    """Pick a lane-dense batch block (BR, L): L a multiple of 128 (<=1024),
    BR a multiple of 8 (<=64), sized for few grid steps with low pad waste."""
    lanes = max(LANE, min(MAX_LANES, LANE * pl.cdiv(n, CHUNK_ROWS * LANE)))
    steps = pl.cdiv(n, MAX_ROWS * lanes)          # step count at the max block
    rows_total = pl.cdiv(n, lanes)
    rows = max(CHUNK_ROWS,
               min(MAX_ROWS,
                   CHUNK_ROWS * pl.cdiv(rows_total, CHUNK_ROWS * steps)))
    return rows, lanes


def net_forward(x, w1, b1, w2, b2):
    """x: (N, 1) float32.  Returns (N, 1) float32."""
    N, f_in = x.shape
    assert f_in == 1
    hidden = w1.shape[1]
    assert w2.shape[0] == hidden and w2.shape[1] == 1

    # Flat SMEM parameter vectors (no hidden padding).
    w1c = w1.reshape(hidden).astype(jnp.float32)
    b1c = b1.reshape(hidden).astype(jnp.float32)
    w2c = w2.reshape(hidden).astype(jnp.float32)
    b2c = b2.reshape(1).astype(jnp.float32)

    BR, L = _choose_block(N)
    block_elems = BR * L
    G = pl.cdiv(N, block_elems)
    n_pad = G * block_elems

    x_flat = jnp.pad(x.reshape(-1), (0, n_pad - N))
    x_slab = x_flat.reshape(G * BR, L)

    out_slab = pl.pallas_call(
        mlp_kernel,
        out_shape=jax.ShapeDtypeStruct((G * BR, L), jnp.float32),
        grid_spec=pltpu.PrefetchScalarGridSpec(
            num_scalar_prefetch=0,
            grid=(G,),
            in_specs=[
                # batch-tiled activations: lane-dense (BR, L) blocks
                pl.BlockSpec((BR, L), lambda i: (i, 0)),
                # tiny parameters: whole-array SMEM residents
                pl.BlockSpec(memory_space=pltpu.MemorySpace.SMEM),
                pl.BlockSpec(memory_space=pltpu.MemorySpace.SMEM),
                pl.BlockSpec(memory_space=pltpu.MemorySpace.SMEM),
                pl.BlockSpec(memory_space=pltpu.MemorySpace.SMEM),
            ],
            out_specs=pl.BlockSpec((BR, L), lambda i: (i, 0)),
        ),
        compiler_params=pltpu.CompilerParams(
            dimension_semantics=("parallel",)),
        cost_estimate=pl.CostEstimate(
            flops=5 * hidden * n_pad,
            transcendentals=0,
            bytes_accessed=8 * n_pad),
    )(x_slab, w1c, b1c, w2c, b2c)

    # Drop padding, restore (N, 1).
    return out_slab.reshape(-1)[:N].reshape(N, 1)


def init_params(key):
    """Deterministic init mimicking PyTorch's default Linear init
    (uniform in +/- 1/sqrt(fan_in))."""
    k1, k2, k3, k4 = jax.random.split(key, 4)
    bound1 = 1.0 / jnp.sqrt(1.0)    # fan_in = 1
    bound2 = 1.0 / jnp.sqrt(50.0)   # fan_in = 50
    w1 = jax.random.uniform(k1, (1, HIDDEN), jnp.float32, -bound1, bound1)
    b1 = jax.random.uniform(k2, (HIDDEN,), jnp.float32, -bound1, bound1)
    w2 = jax.random.uniform(k3, (HIDDEN, 1), jnp.float32, -bound2, bound2)
    b2 = jax.random.uniform(k4, (1,), jnp.float32, -bound2, bound2)
    return w1, b1, w2, b2


def _reference(x, w1, b1, w2, b2):
    return jnp.maximum(x @ w1 + b1[None, :], 0.0) @ w2 + b2[None, :]


if __name__ == "__main__":
    key = jax.random.PRNGKey(0)
    pkey, xkey = jax.random.split(key)
    w1, b1, w2, b2 = init_params(pkey)

    # Case 1: matches the original script's 1000-point linspace input
    # (single (8, 128) block, one grid step).
    x1 = jnp.linspace(0.0, 1.0, 1002, dtype=jnp.float32)[1:-1].reshape(-1, 1)
    out1 = jax.block_until_ready(net_forward(x1, w1, b1, w2, b2))
    ref1 = _reference(x1, w1, b1, w2, b2)
    assert out1.shape == (1000, 1)
    assert jnp.allclose(out1, ref1, atol=1e-5, rtol=1e-5), "mismatch (N=1000)"

    # Case 2: larger batch -> (64, 1024) blocks, 2-step parallel grid
    # (exercises the multi-step pipeline / both v7x TensorCores).
    x2 = jax.random.uniform(xkey, (131072, 1), jnp.float32)
    out2 = jax.block_until_ready(net_forward(x2, w1, b1, w2, b2))
    ref2 = _reference(x2, w1, b1, w2, b2)
    assert out2.shape == (131072, 1)
    assert jnp.allclose(out2, ref2, atol=1e-5, rtol=1e-5), "mismatch (N=131072)"

    print("KERNEL_OK")
</pallas_src>

<mosaic_0001>
module attributes {stable_mosaic.version = 11 : i64} {
  func.func @mlp_kernel(%arg0: i32, %arg1: memref<8x128xf32, #tpu.memory_space<vmem>>, %arg2: memref<50xf32, #tpu.memory_space<smem>>, %arg3: memref<50xf32, #tpu.memory_space<smem>>, %arg4: memref<50xf32, #tpu.memory_space<smem>>, %arg5: memref<1xf32, #tpu.memory_space<smem>>, %arg6: memref<8x128xf32, #tpu.memory_space<vmem>>) attributes {dimension_semantics = [#tpu.dimension_semantics<parallel>], iteration_bounds = array<i64: 1>, scalar_prefetch = 0 : i64, scratch_operands = 0 : i64, tpu.core_type = #tpu.core_type<tc>, window_params = [{transform_indices = @transform_0, window_bounds = array<i64: 8, 128>}, {transform_indices = @transform_1, window_bounds = array<i64: 50>}, {transform_indices = @transform_2, window_bounds = array<i64: 50>}, {transform_indices = @transform_3, window_bounds = array<i64: 50>}, {transform_indices = @transform_4, window_bounds = array<i64: 1>}, {transform_indices = @transform_5, window_bounds = array<i64: 8, 128>}]} {
    %c0 = arith.constant 0 : index
    %0 = memref.load %arg5[%c0] : memref<1xf32, #tpu.memory_space<smem>>
    %c0_i32 = arith.constant 0 : i32
    %c1_i32 = arith.constant 1 : i32
    %1 = arith.muli %c0_i32, %c1_i32 : i32
    %c0_i32_0 = arith.constant 0 : i32
    %2 = arith.addi %c0_i32_0, %1 : i32
    %c8_i32 = arith.constant 8 : i32
    %3 = arith.muli %2, %c8_i32 : i32
    %4 = tpu.assume_multiple %3, 8 : i32
    %5 = arith.index_cast %4 : i32 to index
    %c0_1 = arith.constant 0 : index
    %6 = vector.load %arg1[%5, %c0_1] : memref<8x128xf32, #tpu.memory_space<vmem>>, vector<8x128xf32>
    %cst = arith.constant 0.000000e+00 : f32
    %7 = vector.broadcast %cst : f32 to vector<8x128xf32>
    %8 = vector.broadcast %0 : f32 to vector<8x128xf32>
    %9 = arith.addf %7, %8 : vector<8x128xf32>
    %c0_2 = arith.constant 0 : index
    %10 = memref.load %arg2[%c0_2] : memref<50xf32, #tpu.memory_space<smem>>
    %11 = vector.broadcast %10 : f32 to vector<8x128xf32>
    %12 = arith.mulf %6, %11 : vector<8x128xf32>
    %c0_3 = arith.constant 0 : index
    %13 = memref.load %arg3[%c0_3] : memref<50xf32, #tpu.memory_space<smem>>
    %14 = vector.broadcast %13 : f32 to vector<8x128xf32>
    %15 = arith.addf %12, %14 : vector<8x128xf32>
    %cst_4 = arith.constant 0.000000e+00 : f32
    %16 = vector.broadcast %cst_4 : f32 to vector<8x128xf32>
    %17 = arith.maximumf %15, %16 : vector<8x128xf32>
    %c0_5 = arith.constant 0 : index
    %18 = memref.load %arg4[%c0_5] : memref<50xf32, #tpu.memory_space<smem>>
    %19 = vector.broadcast %18 : f32 to vector<8x128xf32>
    %20 = arith.mulf %17, %19 : vector<8x128xf32>
    %21 = arith.addf %9, %20 : vector<8x128xf32>
    %c1 = arith.constant 1 : index
    %22 = memref.load %arg2[%c1] : memref<50xf32, #tpu.memory_space<smem>>
    %23 = vector.broadcast %22 : f32 to vector<8x128xf32>
    %24 = arith.mulf %6, %23 : vector<8x128xf32>
    %c1_6 = arith.constant 1 : index
    %25 = memref.load %arg3[%c1_6] : memref<50xf32, #tpu.memory_space<smem>>
    %26 = vector.broadcast %25 : f32 to vector<8x128xf32>
    %27 = arith.addf %24, %26 : vector<8x128xf32>
    %cst_7 = arith.constant 0.000000e+00 : f32
    %28 = vector.broadcast %cst_7 : f32 to vector<8x128xf32>
    %29 = arith.maximumf %27, %28 : vector<8x128xf32>
    %c1_8 = arith.constant 1 : index
    %30 = memref.load %arg4[%c1_8] : memref<50xf32, #tpu.memory_space<smem>>
    %31 = vector.broadcast %30 : f32 to vector<8x128xf32>
    %32 = arith.mulf %29, %31 : vector<8x128xf32>
    %33 = arith.addf %21, %32 : vector<8x128xf32>
    %c2 = arith.constant 2 : index
    %34 = memref.load %arg2[%c2] : memref<50xf32, #tpu.memory_space<smem>>
    %35 = vector.broadcast %34 : f32 to vector<8x128xf32>
    %36 = arith.mulf %6, %35 : vector<8x128xf32>
    %c2_9 = arith.constant 2 : index
    %37 = memref.load %arg3[%c2_9] : memref<50xf32, #tpu.memory_space<smem>>
    %38 = vector.broadcast %37 : f32 to vector<8x128xf32>
    %39 = arith.addf %36, %38 : vector<8x128xf32>
    %cst_10 = arith.constant 0.000000e+00 : f32
    %40 = vector.broadcast %cst_10 : f32 to vector<8x128xf32>
    %41 = arith.maximumf %39, %40 : vector<8x128xf32>
    %c2_11 = arith.constant 2 : index
    %42 = memref.load %arg4[%c2_11] : memref<50xf32, #tpu.memory_space<smem>>
    %43 = vector.broadcast %42 : f32 to vector<8x128xf32>
    %44 = arith.mulf %41, %43 : vector<8x128xf32>
    %45 = arith.addf %33, %44 : vector<8x128xf32>
    %c3 = arith.constant 3 : index
    %46 = memref.load %arg2[%c3] : memref<50xf32, #tpu.memory_space<smem>>
    %47 = vector.broadcast %46 : f32 to vector<8x128xf32>
    %48 = arith.mulf %6, %47 : vector<8x128xf32>
    %c3_12 = arith.constant 3 : index
    %49 = memref.load %arg3[%c3_12] : memref<50xf32, #tpu.memory_space<smem>>
    %50 = vector.broadcast %49 : f32 to vector<8x128xf32>
    %51 = arith.addf %48, %50 : vector<8x128xf32>
    %cst_13 = arith.constant 0.000000e+00 : f32
    %52 = vector.broadcast %cst_13 : f32 to vector<8x128xf32>
    %53 = arith.maximumf %51, %52 : vector<8x128xf32>
    %c3_14 = arith.constant 3 : index
    %54 = memref.load %arg4[%c3_14] : memref<50xf32, #tpu.memory_space<smem>>
    %55 = vector.broadcast %54 : f32 to vector<8x128xf32>
    %56 = arith.mulf %53, %55 : vector<8x128xf32>
    %57 = arith.addf %45, %56 : vector<8x128xf32>
    %c4 = arith.constant 4 : index
    %58 = memref.load %arg2[%c4] : memref<50xf32, #tpu.memory_space<smem>>
    %59 = vector.broadcast %58 : f32 to vector<8x128xf32>
    %60 = arith.mulf %6, %59 : vector<8x128xf32>
    %c4_15 = arith.constant 4 : index
    %61 = memref.load %arg3[%c4_15] : memref<50xf32, #tpu.memory_space<smem>>
    %62 = vector.broadcast %61 : f32 to vector<8x128xf32>
    %63 = arith.addf %60, %62 : vector<8x128xf32>
    %cst_16 = arith.constant 0.000000e+00 : f32
    %64 = vector.broadcast %cst_16 : f32 to vector<8x128xf32>
    %65 = arith.maximumf %63, %64 : vector<8x128xf32>
    %c4_17 = arith.constant 4 : index
    %66 = memref.load %arg4[%c4_17] : memref<50xf32, #tpu.memory_space<smem>>
    %67 = vector.broadcast %66 : f32 to vector<8x128xf32>
    %68 = arith.mulf %65, %67 : vector<8x128xf32>
    %69 = arith.addf %57, %68 : vector<8x128xf32>
    %c5 = arith.constant 5 : index
    %70 = memref.load %arg2[%c5] : memref<50xf32, #tpu.memory_space<smem>>
    %71 = vector.broadcast %70 : f32 to vector<8x128xf32>
    %72 = arith.mulf %6, %71 : vector<8x128xf32>
    %c5_18 = arith.constant 5 : index
    %73 = memref.load %arg3[%c5_18] : memref<50xf32, #tpu.memory_space<smem>>
    %74 = vector.broadcast %73 : f32 to vector<8x128xf32>
    %75 = arith.addf %72, %74 : vector<8x128xf32>
    %cst_19 = arith.constant 0.000000e+00 : f32
    %76 = vector.broadcast %cst_19 : f32 to vector<8x128xf32>
    %77 = arith.maximumf %75, %76 : vector<8x128xf32>
    %c5_20 = arith.constant 5 : index
    %78 = memref.load %arg4[%c5_20] : memref<50xf32, #tpu.memory_space<smem>>
    %79 = vector.broadcast %78 : f32 to vector<8x128xf32>
    %80 = arith.mulf %77, %79 : vector<8x128xf32>
    %81 = arith.addf %69, %80 : vector<8x128xf32>
    %c6 = arith.constant 6 : index
    %82 = memref.load %arg2[%c6] : memref<50xf32, #tpu.memory_space<smem>>
    %83 = vector.broadcast %82 : f32 to vector<8x128xf32>
    %84 = arith.mulf %6, %83 : vector<8x128xf32>
    %c6_21 = arith.constant 6 : index
    %85 = memref.load %arg3[%c6_21] : memref<50xf32, #tpu.memory_space<smem>>
    %86 = vector.broadcast %85 : f32 to vector<8x128xf32>
    %87 = arith.addf %84, %86 : vector<8x128xf32>
    %cst_22 = arith.constant 0.000000e+00 : f32
    %88 = vector.broadcast %cst_22 : f32 to vector<8x128xf32>
    %89 = arith.maximumf %87, %88 : vector<8x128xf32>
    %c6_23 = arith.constant 6 : index
    %90 = memref.load %arg4[%c6_23] : memref<50xf32, #tpu.memory_space<smem>>
    %91 = vector.broadcast %90 : f32 to vector<8x128xf32>
    %92 = arith.mulf %89, %91 : vector<8x128xf32>
    %93 = arith.addf %81, %92 : vector<8x128xf32>
    %c7 = arith.constant 7 : index
    %94 = memref.load %arg2[%c7] : memref<50xf32, #tpu.memory_space<smem>>
    %95 = vector.broadcast %94 : f32 to vector<8x128xf32>
    %96 = arith.mulf %6, %95 : vector<8x128xf32>
    %c7_24 = arith.constant 7 : index
    %97 = memref.load %arg3[%c7_24] : memref<50xf32, #tpu.memory_space<smem>>
    %98 = vector.broadcast %97 : f32 to vector<8x128xf32>
    %99 = arith.addf %96, %98 : vector<8x128xf32>
    %cst_25 = arith.constant 0.000000e+00 : f32
    %100 = vector.broadcast %cst_25 : f32 to vector<8x128xf32>
    %101 = arith.maximumf %99, %100 : vector<8x128xf32>
    %c7_26 = arith.constant 7 : index
    %102 = memref.load %arg4[%c7_26] : memref<50xf32, #tpu.memory_space<smem>>
    %103 = vector.broadcast %102 : f32 to vector<8x128xf32>
    %104 = arith.mulf %101, %103 : vector<8x128xf32>
    %105 = arith.addf %93, %104 : vector<8x128xf32>
    %c8 = arith.constant 8 : index
    %106 = memref.load %arg2[%c8] : memref<50xf32, #tpu.memory_space<smem>>
    %107 = vector.broadcast %106 : f32 to vector<8x128xf32>
    %108 = arith.mulf %6, %107 : vector<8x128xf32>
    %c8_27 = arith.constant 8 : index
    %109 = memref.load %arg3[%c8_27] : memref<50xf32, #tpu.memory_space<smem>>
    %110 = vector.broadcast %109 : f32 to vector<8x128xf32>
    %111 = arith.addf %108, %110 : vector<8x128xf32>
    %cst_28 = arith.constant 0.000000e+00 : f32
    %112 = vector.broadcast %cst_28 : f32 to vector<8x128xf32>
    %113 = arith.maximumf %111, %112 : vector<8x128xf32>
    %c8_29 = arith.constant 8 : index
    %114 = memref.load %arg4[%c8_29] : memref<50xf32, #tpu.memory_space<smem>>
    %115 = vector.broadcast %114 : f32 to vector<8x128xf32>
    %116 = arith.mulf %113, %115 : vector<8x128xf32>
    %117 = arith.addf %105, %116 : vector<8x128xf32>
    %c9 = arith.constant 9 : index
    %118 = memref.load %arg2[%c9] : memref<50xf32, #tpu.memory_space<smem>>
    %119 = vector.broadcast %118 : f32 to vector<8x128xf32>
    %120 = arith.mulf %6, %119 : vector<8x128xf32>
    %c9_30 = arith.constant 9 : index
    %121 = memref.load %arg3[%c9_30] : memref<50xf32, #tpu.memory_space<smem>>
    %122 = vector.broadcast %121 : f32 to vector<8x128xf32>
    %123 = arith.addf %120, %122 : vector<8x128xf32>
    %cst_31 = arith.constant 0.000000e+00 : f32
    %124 = vector.broadcast %cst_31 : f32 to vector<8x128xf32>
    %125 = arith.maximumf %123, %124 : vector<8x128xf32>
    %c9_32 = arith.constant 9 : index
    %126 = memref.load %arg4[%c9_32] : memref<50xf32, #tpu.memory_space<smem>>
    %127 = vector.broadcast %126 : f32 to vector<8x128xf32>
    %128 = arith.mulf %125, %127 : vector<8x128xf32>
    %129 = arith.addf %117, %128 : vector<8x128xf32>
    %c10 = arith.constant 10 : index
    %130 = memref.load %arg2[%c10] : memref<50xf32, #tpu.memory_space<smem>>
    %131 = vector.broadcast %130 : f32 to vector<8x128xf32>
    %132 = arith.mulf %6, %131 : vector<8x128xf32>
    %c10_33 = arith.constant 10 : index
    %133 = memref.load %arg3[%c10_33] : memref<50xf32, #tpu.memory_space<smem>>
    %134 = vector.broadcast %133 : f32 to vector<8x128xf32>
    %135 = arith.addf %132, %134 : vector<8x128xf32>
    %cst_34 = arith.constant 0.000000e+00 : f32
    %136 = vector.broadcast %cst_34 : f32 to vector<8x128xf32>
    %137 = arith.maximumf %135, %136 : vector<8x128xf32>
    %c10_35 = arith.constant 10 : index
    %138 = memref.load %arg4[%c10_35] : memref<50xf32, #tpu.memory_space<smem>>
    %139 = vector.broadcast %138 : f32 to vector<8x128xf32>
    %140 = arith.mulf %137, %139 : vector<8x128xf32>
    %141 = arith.addf %129, %140 : vector<8x128xf32>
    %c11 = arith.constant 11 : index
    %142 = memref.load %arg2[%c11] : memref<50xf32, #tpu.memory_space<smem>>
    %143 = vector.broadcast %142 : f32 to vector<8x128xf32>
    %144 = arith.mulf %6, %143 : vector<8x128xf32>
    %c11_36 = arith.constant 11 : index
    %145 = memref.load %arg3[%c11_36] : memref<50xf32, #tpu.memory_space<smem>>
    %146 = vector.broadcast %145 : f32 to vector<8x128xf32>
    %147 = arith.addf %144, %146 : vector<8x128xf32>
    %cst_37 = arith.constant 0.000000e+00 : f32
    %148 = vector.broadcast %cst_37 : f32 to vector<8x128xf32>
    %149 = arith.maximumf %147, %148 : vector<8x128xf32>
    %c11_38 = arith.constant 11 : index
    %150 = memref.load %arg4[%c11_38] : memref<50xf32, #tpu.memory_space<smem>>
    %151 = vector.broadcast %150 : f32 to vector<8x128xf32>
    %152 = arith.mulf %149, %151 : vector<8x128xf32>
    %153 = arith.addf %141, %152 : vector<8x128xf32>
    %c12 = arith.constant 12 : index
    %154 = memref.load %arg2[%c12] : memref<50xf32, #tpu.memory_space<smem>>
    %155 = vector.broadcast %154 : f32 to vector<8x128xf32>
    %156 = arith.mulf %6, %155 : vector<8x128xf32>
    %c12_39 = arith.constant 12 : index
    %157 = memref.load %arg3[%c12_39] : memref<50xf32, #tpu.memory_space<smem>>
    %158 = vector.broadcast %157 : f32 to vector<8x128xf32>
    %159 = arith.addf %156, %158 : vector<8x128xf32>
    %cst_40 = arith.constant 0.000000e+00 : f32
    %160 = vector.broadcast %cst_40 : f32 to vector<8x128xf32>
    %161 = arith.maximumf %159, %160 : vector<8x128xf32>
    %c12_41 = arith.constant 12 : index
    %162 = memref.load %arg4[%c12_41] : memref<50xf32, #tpu.memory_space<smem>>
    %163 = vector.broadcast %162 : f32 to vector<8x128xf32>
    %164 = arith.mulf %161, %163 : vector<8x128xf32>
    %165 = arith.addf %153, %164 : vector<8x128xf32>
    %c13 = arith.constant 13 : index
    %166 = memref.load %arg2[%c13] : memref<50xf32, #tpu.memory_space<smem>>
    %167 = vector.broadcast %166 : f32 to vector<8x128xf32>
    %168 = arith.mulf %6, %167 : vector<8x128xf32>
    %c13_42 = arith.constant 13 : index
    %169 = memref.load %arg3[%c13_42] : memref<50xf32, #tpu.memory_space<smem>>
    %170 = vector.broadcast %169 : f32 to vector<8x128xf32>
    %171 = arith.addf %168, %170 : vector<8x128xf32>
    %cst_43 = arith.constant 0.000000e+00 : f32
    %172 = vector.broadcast %cst_43 : f32 to vector<8x128xf32>
    %173 = arith.maximumf %171, %172 : vector<8x128xf32>
    %c13_44 = arith.constant 13 : index
    %174 = memref.load %arg4[%c13_44] : memref<50xf32, #tpu.memory_space<smem>>
    %175 = vector.broadcast %174 : f32 to vector<8x128xf32>
    %176 = arith.mulf %173, %175 : vector<8x128xf32>
    %177 = arith.addf %165, %176 : vector<8x128xf32>
    %c14 = arith.constant 14 : index
    %178 = memref.load %arg2[%c14] : memref<50xf32, #tpu.memory_space<smem>>
    %179 = vector.broadcast %178 : f32 to vector<8x128xf32>
    %180 = arith.mulf %6, %179 : vector<8x128xf32>
    %c14_45 = arith.constant 14 : index
    %181 = memref.load %arg3[%c14_45] : memref<50xf32, #tpu.memory_space<smem>>
    %182 = vector.broadcast %181 : f32 to vector<8x128xf32>
    %183 = arith.addf %180, %182 : vector<8x128xf32>
    %cst_46 = arith.constant 0.000000e+00 : f32
    %184 = vector.broadcast %cst_46 : f32 to vector<8x128xf32>
    %185 = arith.maximumf %183, %184 : vector<8x128xf32>
    %c14_47 = arith.constant 14 : index
    %186 = memref.load %arg4[%c14_47] : memref<50xf32, #tpu.memory_space<smem>>
    %187 = vector.broadcast %186 : f32 to vector<8x128xf32>
    %188 = arith.mulf %185, %187 : vector<8x128xf32>
    %189 = arith.addf %177, %188 : vector<8x128xf32>
    %c15 = arith.constant 15 : index
    %190 = memref.load %arg2[%c15] : memref<50xf32, #tpu.memory_space<smem>>
    %191 = vector.broadcast %190 : f32 to vector<8x128xf32>
    %192 = arith.mulf %6, %191 : vector<8x128xf32>
    %c15_48 = arith.constant 15 : index
    %193 = memref.load %arg3[%c15_48] : memref<50xf32, #tpu.memory_space<smem>>
    %194 = vector.broadcast %193 : f32 to vector<8x128xf32>
    %195 = arith.addf %192, %194 : vector<8x128xf32>
    %cst_49 = arith.constant 0.000000e+00 : f32
    %196 = vector.broadcast %cst_49 : f32 to vector<8x128xf32>
    %197 = arith.maximumf %195, %196 : vector<8x128xf32>
    %c15_50 = arith.constant 15 : index
    %198 = memref.load %arg4[%c15_50] : memref<50xf32, #tpu.memory_space<smem>>
    %199 = vector.broadcast %198 : f32 to vector<8x128xf32>
    %200 = arith.mulf %197, %199 : vector<8x128xf32>
    %201 = arith.addf %189, %200 : vector<8x128xf32>
    %c16 = arith.constant 16 : index
    %202 = memref.load %arg2[%c16] : memref<50xf32, #tpu.memory_space<smem>>
    %203 = vector.broadcast %202 : f32 to vector<8x128xf32>
    %204 = arith.mulf %6, %203 : vector<8x128xf32>
    %c16_51 = arith.constant 16 : index
    %205 = memref.load %arg3[%c16_51] : memref<50xf32, #tpu.memory_space<smem>>
    %206 = vector.broadcast %205 : f32 to vector<8x128xf32>
    %207 = arith.addf %204, %206 : vector<8x128xf32>
    %cst_52 = arith.constant 0.000000e+00 : f32
    %208 = vector.broadcast %cst_52 : f32 to vector<8x128xf32>
    %209 = arith.maximumf %207, %208 : vector<8x128xf32>
    %c16_53 = arith.constant 16 : index
    %210 = memref.load %arg4[%c16_53] : memref<50xf32, #tpu.memory_space<smem>>
    %211 = vector.broadcast %210 : f32 to vector<8x128xf32>
    %212 = arith.mulf %209, %211 : vector<8x128xf32>
    %213 = arith.addf %201, %212 : vector<8x128xf32>
    %c17 = arith.constant 17 : index
    %214 = memref.load %arg2[%c17] : memref<50xf32, #tpu.memory_space<smem>>
    %215 = vector.broadcast %214 : f32 to vector<8x128xf32>
    %216 = arith.mulf %6, %215 : vector<8x128xf32>
    %c17_54 = arith.constant 17 : index
    %217 = memref.load %arg3[%c17_54] : memref<50xf32, #tpu.memory_space<smem>>
    %218 = vector.broadcast %217 : f32 to vector<8x128xf32>
    %219 = arith.addf %216, %218 : vector<8x128xf32>
    %cst_55 = arith.constant 0.000000e+00 : f32
    %220 = vector.broadcast %cst_55 : f32 to vector<8x128xf32>
    %221 = arith.maximumf %219, %220 : vector<8x128xf32>
    %c17_56 = arith.constant 17 : index
    %222 = memref.load %arg4[%c17_56] : memref<50xf32, #tpu.memory_space<smem>>
    %223 = vector.broadcast %222 : f32 to vector<8x128xf32>
    %224 = arith.mulf %221, %223 : vector<8x128xf32>
    %225 = arith.addf %213, %224 : vector<8x128xf32>
    %c18 = arith.constant 18 : index
    %226 = memref.load %arg2[%c18] : memref<50xf32, #tpu.memory_space<smem>>
    %227 = vector.broadcast %226 : f32 to vector<8x128xf32>
    %228 = arith.mulf %6, %227 : vector<8x128xf32>
    %c18_57 = arith.constant 18 : index
    %229 = memref.load %arg3[%c18_57] : memref<50xf32, #tpu.memory_space<smem>>
    %230 = vector.broadcast %229 : f32 to vector<8x128xf32>
    %231 = arith.addf %228, %230 : vector<8x128xf32>
    %cst_58 = arith.constant 0.000000e+00 : f32
    %232 = vector.broadcast %cst_58 : f32 to vector<8x128xf32>
    %233 = arith.maximumf %231, %232 : vector<8x128xf32>
    %c18_59 = arith.constant 18 : index
    %234 = memref.load %arg4[%c18_59] : memref<50xf32, #tpu.memory_space<smem>>
    %235 = vector.broadcast %234 : f32 to vector<8x128xf32>
    %236 = arith.mulf %233, %235 : vector<8x128xf32>
    %237 = arith.addf %225, %236 : vector<8x128xf32>
    %c19 = arith.constant 19 : index
    %238 = memref.load %arg2[%c19] : memref<50xf32, #tpu.memory_space<smem>>
    %239 = vector.broadcast %238 : f32 to vector<8x128xf32>
    %240 = arith.mulf %6, %239 : vector<8x128xf32>
    %c19_60 = arith.constant 19 : index
    %241 = memref.load %arg3[%c19_60] : memref<50xf32, #tpu.memory_space<smem>>
    %242 = vector.broadcast %241 : f32 to vector<8x128xf32>
    %243 = arith.addf %240, %242 : vector<8x128xf32>
    %cst_61 = arith.constant 0.000000e+00 : f32
    %244 = vector.broadcast %cst_61 : f32 to vector<8x128xf32>
    %245 = arith.maximumf %243, %244 : vector<8x128xf32>
    %c19_62 = arith.constant 19 : index
    %246 = memref.load %arg4[%c19_62] : memref<50xf32, #tpu.memory_space<smem>>
    %247 = vector.broadcast %246 : f32 to vector<8x128xf32>
    %248 = arith.mulf %245, %247 : vector<8x128xf32>
    %249 = arith.addf %237, %248 : vector<8x128xf32>
    %c20 = arith.constant 20 : index
    %250 = memref.load %arg2[%c20] : memref<50xf32, #tpu.memory_space<smem>>
    %251 = vector.broadcast %250 : f32 to vector<8x128xf32>
    %252 = arith.mulf %6, %251 : vector<8x128xf32>
    %c20_63 = arith.constant 20 : index
    %253 = memref.load %arg3[%c20_63] : memref<50xf32, #tpu.memory_space<smem>>
    %254 = vector.broadcast %253 : f32 to vector<8x128xf32>
    %255 = arith.addf %252, %254 : vector<8x128xf32>
    %cst_64 = arith.constant 0.000000e+00 : f32
    %256 = vector.broadcast %cst_64 : f32 to vector<8x128xf32>
    %257 = arith.maximumf %255, %256 : vector<8x128xf32>
    %c20_65 = arith.constant 20 : index
    %258 = memref.load %arg4[%c20_65] : memref<50xf32, #tpu.memory_space<smem>>
    %259 = vector.broadcast %258 : f32 to vector<8x128xf32>
    %260 = arith.mulf %257, %259 : vector<8x128xf32>
    %261 = arith.addf %249, %260 : vector<8x128xf32>
    %c21 = arith.constant 21 : index
    %262 = memref.load %arg2[%c21] : memref<50xf32, #tpu.memory_space<smem>>
    %263 = vector.broadcast %262 : f32 to vector<8x128xf32>
    %264 = arith.mulf %6, %263 : vector<8x128xf32>
    %c21_66 = arith.constant 21 : index
    %265 = memref.load %arg3[%c21_66] : memref<50xf32, #tpu.memory_space<smem>>
    %266 = vector.broadcast %265 : f32 to vector<8x128xf32>
    %267 = arith.addf %264, %266 : vector<8x128xf32>
    %cst_67 = arith.constant 0.000000e+00 : f32
    %268 = vector.broadcast %cst_67 : f32 to vector<8x128xf32>
    %269 = arith.maximumf %267, %268 : vector<8x128xf32>
    %c21_68 = arith.constant 21 : index
    %270 = memref.load %arg4[%c21_68] : memref<50xf32, #tpu.memory_space<smem>>
    %271 = vector.broadcast %270 : f32 to vector<8x128xf32>
    %272 = arith.mulf %269, %271 : vector<8x128xf32>
    %273 = arith.addf %261, %272 : vector<8x128xf32>
    %c22 = arith.constant 22 : index
    %274 = memref.load %arg2[%c22] : memref<50xf32, #tpu.memory_space<smem>>
    %275 = vector.broadcast %274 : f32 to vector<8x128xf32>
    %276 = arith.mulf %6, %275 : vector<8x128xf32>
    %c22_69 = arith.constant 22 : index
    %277 = memref.load %arg3[%c22_69] : memref<50xf32, #tpu.memory_space<smem>>
    %278 = vector.broadcast %277 : f32 to vector<8x128xf32>
    %279 = arith.addf %276, %278 : vector<8x128xf32>
    %cst_70 = arith.constant 0.000000e+00 : f32
    %280 = vector.broadcast %cst_70 : f32 to vector<8x128xf32>
    %281 = arith.maximumf %279, %280 : vector<8x128xf32>
    %c22_71 = arith.constant 22 : index
    %282 = memref.load %arg4[%c22_71] : memref<50xf32, #tpu.memory_space<smem>>
    %283 = vector.broadcast %282 : f32 to vector<8x128xf32>
    %284 = arith.mulf %281, %283 : vector<8x128xf32>
    %285 = arith.addf %273, %284 : vector<8x128xf32>
    %c23 = arith.constant 23 : index
    %286 = memref.load %arg2[%c23] : memref<50xf32, #tpu.memory_space<smem>>
    %287 = vector.broadcast %286 : f32 to vector<8x128xf32>
    %288 = arith.mulf %6, %287 : vector<8x128xf32>
    %c23_72 = arith.constant 23 : index
    %289 = memref.load %arg3[%c23_72] : memref<50xf32, #tpu.memory_space<smem>>
    %290 = vector.broadcast %289 : f32 to vector<8x128xf32>
    %291 = arith.addf %288, %290 : vector<8x128xf32>
    %cst_73 = arith.constant 0.000000e+00 : f32
    %292 = vector.broadcast %cst_73 : f32 to vector<8x128xf32>
    %293 = arith.maximumf %291, %292 : vector<8x128xf32>
    %c23_74 = arith.constant 23 : index
    %294 = memref.load %arg4[%c23_74] : memref<50xf32, #tpu.memory_space<smem>>
    %295 = vector.broadcast %294 : f32 to vector<8x128xf32>
    %296 = arith.mulf %293, %295 : vector<8x128xf32>
    %297 = arith.addf %285, %296 : vector<8x128xf32>
    %c24 = arith.constant 24 : index
    %298 = memref.load %arg2[%c24] : memref<50xf32, #tpu.memory_space<smem>>
    %299 = vector.broadcast %298 : f32 to vector<8x128xf32>
    %300 = arith.mulf %6, %299 : vector<8x128xf32>
    %c24_75 = arith.constant 24 : index
    %301 = memref.load %arg3[%c24_75] : memref<50xf32, #tpu.memory_space<smem>>
    %302 = vector.broadcast %301 : f32 to vector<8x128xf32>
    %303 = arith.addf %300, %302 : vector<8x128xf32>
    %cst_76 = arith.constant 0.000000e+00 : f32
    %304 = vector.broadcast %cst_76 : f32 to vector<8x128xf32>
    %305 = arith.maximumf %303, %304 : vector<8x128xf32>
    %c24_77 = arith.constant 24 : index
    %306 = memref.load %arg4[%c24_77] : memref<50xf32, #tpu.memory_space<smem>>
    %307 = vector.broadcast %306 : f32 to vector<8x128xf32>
    %308 = arith.mulf %305, %307 : vector<8x128xf32>
    %309 = arith.addf %297, %308 : vector<8x128xf32>
    %c25 = arith.constant 25 : index
    %310 = memref.load %arg2[%c25] : memref<50xf32, #tpu.memory_space<smem>>
    %311 = vector.broadcast %310 : f32 to vector<8x128xf32>
    %312 = arith.mulf %6, %311 : vector<8x128xf32>
    %c25_78 = arith.constant 25 : index
    %313 = memref.load %arg3[%c25_78] : memref<50xf32, #tpu.memory_space<smem>>
    %314 = vector.broadcast %313 : f32 to vector<8x128xf32>
    %315 = arith.addf %312, %314 : vector<8x128xf32>
    %cst_79 = arith.constant 0.000000e+00 : f32
    %316 = vector.broadcast %cst_79 : f32 to vector<8x128xf32>
    %317 = arith.maximumf %315, %316 : vector<8x128xf32>
    %c25_80 = arith.constant 25 : index
    %318 = memref.load %arg4[%c25_80] : memref<50xf32, #tpu.memory_space<smem>>
    %319 = vector.broadcast %318 : f32 to vector<8x128xf32>
    %320 = arith.mulf %317, %319 : vector<8x128xf32>
    %321 = arith.addf %309, %320 : vector<8x128xf32>
    %c26 = arith.constant 26 : index
    %322 = memref.load %arg2[%c26] : memref<50xf32, #tpu.memory_space<smem>>
    %323 = vector.broadcast %322 : f32 to vector<8x128xf32>
    %324 = arith.mulf %6, %323 : vector<8x128xf32>
    %c26_81 = arith.constant 26 : index
    %325 = memref.load %arg3[%c26_81] : memref<50xf32, #tpu.memory_space<smem>>
    %326 = vector.broadcast %325 : f32 to vector<8x128xf32>
    %327 = arith.addf %324, %326 : vector<8x128xf32>
    %cst_82 = arith.constant 0.000000e+00 : f32
    %328 = vector.broadcast %cst_82 : f32 to vector<8x128xf32>
    %329 = arith.maximumf %327, %328 : vector<8x128xf32>
    %c26_83 = arith.constant 26 : index
    %330 = memref.load %arg4[%c26_83] : memref<50xf32, #tpu.memory_space<smem>>
    %331 = vector.broadcast %330 : f32 to vector<8x128xf32>
    %332 = arith.mulf %329, %331 : vector<8x128xf32>
    %333 = arith.addf %321, %332 : vector<8x128xf32>
    %c27 = arith.constant 27 : index
    %334 = memref.load %arg2[%c27] : memref<50xf32, #tpu.memory_space<smem>>
    %335 = vector.broadcast %334 : f32 to vector<8x128xf32>
    %336 = arith.mulf %6, %335 : vector<8x128xf32>
    %c27_84 = arith.constant 27 : index
    %337 = memref.load %arg3[%c27_84] : memref<50xf32, #tpu.memory_space<smem>>
    %338 = vector.broadcast %337 : f32 to vector<8x128xf32>
    %339 = arith.addf %336, %338 : vector<8x128xf32>
    %cst_85 = arith.constant 0.000000e+00 : f32
    %340 = vector.broadcast %cst_85 : f32 to vector<8x128xf32>
    %341 = arith.maximumf %339, %340 : vector<8x128xf32>
    %c27_86 = arith.constant 27 : index
    %342 = memref.load %arg4[%c27_86] : memref<50xf32, #tpu.memory_space<smem>>
    %343 = vector.broadcast %342 : f32 to vector<8x128xf32>
    %344 = arith.mulf %341, %343 : vector<8x128xf32>
    %345 = arith.addf %333, %344 : vector<8x128xf32>
    %c28 = arith.constant 28 : index
    %346 = memref.load %arg2[%c28] : memref<50xf32, #tpu.memory_space<smem>>
    %347 = vector.broadcast %346 : f32 to vector<8x128xf32>
    %348 = arith.mulf %6, %347 : vector<8x128xf32>
    %c28_87 = arith.constant 28 : index
    %349 = memref.load %arg3[%c28_87] : memref<50xf32, #tpu.memory_space<smem>>
    %350 = vector.broadcast %349 : f32 to vector<8x128xf32>
    %351 = arith.addf %348, %350 : vector<8x128xf32>
    %cst_88 = arith.constant 0.000000e+00 : f32
    %352 = vector.broadcast %cst_88 : f32 to vector<8x128xf32>
    %353 = arith.maximumf %351, %352 : vector<8x128xf32>
    %c28_89 = arith.constant 28 : index
    %354 = memref.load %arg4[%c28_89] : memref<50xf32, #tpu.memory_space<smem>>
    %355 = vector.broadcast %354 : f32 to vector<8x128xf32>
    %356 = arith.mulf %353, %355 : vector<8x128xf32>
    %357 = arith.addf %345, %356 : vector<8x128xf32>
    %c29 = arith.constant 29 : index
    %358 = memref.load %arg2[%c29] : memref<50xf32, #tpu.memory_space<smem>>
    %359 = vector.broadcast %358 : f32 to vector<8x128xf32>
    %360 = arith.mulf %6, %359 : vector<8x128xf32>
    %c29_90 = arith.constant 29 : index
    %361 = memref.load %arg3[%c29_90] : memref<50xf32, #tpu.memory_space<smem>>
    %362 = vector.broadcast %361 : f32 to vector<8x128xf32>
    %363 = arith.addf %360, %362 : vector<8x128xf32>
    %cst_91 = arith.constant 0.000000e+00 : f32
    %364 = vector.broadcast %cst_91 : f32 to vector<8x128xf32>
    %365 = arith.maximumf %363, %364 : vector<8x128xf32>
    %c29_92 = arith.constant 29 : index
    %366 = memref.load %arg4[%c29_92] : memref<50xf32, #tpu.memory_space<smem>>
    %367 = vector.broadcast %366 : f32 to vector<8x128xf32>
    %368 = arith.mulf %365, %367 : vector<8x128xf32>
    %369 = arith.addf %357, %368 : vector<8x128xf32>
    %c30 = arith.constant 30 : index
    %370 = memref.load %arg2[%c30] : memref<50xf32, #tpu.memory_space<smem>>
    %371 = vector.broadcast %370 : f32 to vector<8x128xf32>
    %372 = arith.mulf %6, %371 : vector<8x128xf32>
    %c30_93 = arith.constant 30 : index
    %373 = memref.load %arg3[%c30_93] : memref<50xf32, #tpu.memory_space<smem>>
    %374 = vector.broadcast %373 : f32 to vector<8x128xf32>
    %375 = arith.addf %372, %374 : vector<8x128xf32>
    %cst_94 = arith.constant 0.000000e+00 : f32
    %376 = vector.broadcast %cst_94 : f32 to vector<8x128xf32>
    %377 = arith.maximumf %375, %376 : vector<8x128xf32>
    %c30_95 = arith.constant 30 : index
    %378 = memref.load %arg4[%c30_95] : memref<50xf32, #tpu.memory_space<smem>>
    %379 = vector.broadcast %378 : f32 to vector<8x128xf32>
    %380 = arith.mulf %377, %379 : vector<8x128xf32>
    %381 = arith.addf %369, %380 : vector<8x128xf32>
    %c31 = arith.constant 31 : index
    %382 = memref.load %arg2[%c31] : memref<50xf32, #tpu.memory_space<smem>>
    %383 = vector.broadcast %382 : f32 to vector<8x128xf32>
    %384 = arith.mulf %6, %383 : vector<8x128xf32>
    %c31_96 = arith.constant 31 : index
    %385 = memref.load %arg3[%c31_96] : memref<50xf32, #tpu.memory_space<smem>>
    %386 = vector.broadcast %385 : f32 to vector<8x128xf32>
    %387 = arith.addf %384, %386 : vector<8x128xf32>
    %cst_97 = arith.constant 0.000000e+00 : f32
    %388 = vector.broadcast %cst_97 : f32 to vector<8x128xf32>
    %389 = arith.maximumf %387, %388 : vector<8x128xf32>
    %c31_98 = arith.constant 31 : index
    %390 = memref.load %arg4[%c31_98] : memref<50xf32, #tpu.memory_space<smem>>
    %391 = vector.broadcast %390 : f32 to vector<8x128xf32>
    %392 = arith.mulf %389, %391 : vector<8x128xf32>
    %393 = arith.addf %381, %392 : vector<8x128xf32>
    %c32 = arith.constant 32 : index
    %394 = memref.load %arg2[%c32] : memref<50xf32, #tpu.memory_space<smem>>
    %395 = vector.broadcast %394 : f32 to vector<8x128xf32>
    %396 = arith.mulf %6, %395 : vector<8x128xf32>
    %c32_99 = arith.constant 32 : index
    %397 = memref.load %arg3[%c32_99] : memref<50xf32, #tpu.memory_space<smem>>
    %398 = vector.broadcast %397 : f32 to vector<8x128xf32>
    %399 = arith.addf %396, %398 : vector<8x128xf32>
    %cst_100 = arith.constant 0.000000e+00 : f32
    %400 = vector.broadcast %cst_100 : f32 to vector<8x128xf32>
    %401 = arith.maximumf %399, %400 : vector<8x128xf32>
    %c32_101 = arith.constant 32 : index
    %402 = memref.load %arg4[%c32_101] : memref<50xf32, #tpu.memory_space<smem>>
    %403 = vector.broadcast %402 : f32 to vector<8x128xf32>
    %404 = arith.mulf %401, %403 : vector<8x128xf32>
    %405 = arith.addf %393, %404 : vector<8x128xf32>
    %c33 = arith.constant 33 : index
    %406 = memref.load %arg2[%c33] : memref<50xf32, #tpu.memory_space<smem>>
    %407 = vector.broadcast %406 : f32 to vector<8x128xf32>
    %408 = arith.mulf %6, %407 : vector<8x128xf32>
    %c33_102 = arith.constant 33 : index
    %409 = memref.load %arg3[%c33_102] : memref<50xf32, #tpu.memory_space<smem>>
    %410 = vector.broadcast %409 : f32 to vector<8x128xf32>
    %411 = arith.addf %408, %410 : vector<8x128xf32>
    %cst_103 = arith.constant 0.000000e+00 : f32
    %412 = vector.broadcast %cst_103 : f32 to vector<8x128xf32>
    %413 = arith.maximumf %411, %412 : vector<8x128xf32>
    %c33_104 = arith.constant 33 : index
    %414 = memref.load %arg4[%c33_104] : memref<50xf32, #tpu.memory_space<smem>>
    %415 = vector.broadcast %414 : f32 to vector<8x128xf32>
    %416 = arith.mulf %413, %415 : vector<8x128xf32>
    %417 = arith.addf %405, %416 : vector<8x128xf32>
    %c34 = arith.constant 34 : index
    %418 = memref.load %arg2[%c34] : memref<50xf32, #tpu.memory_space<smem>>
    %419 = vector.broadcast %418 : f32 to vector<8x128xf32>
    %420 = arith.mulf %6, %419 : vector<8x128xf32>
    %c34_105 = arith.constant 34 : index
    %421 = memref.load %arg3[%c34_105] : memref<50xf32, #tpu.memory_space<smem>>
    %422 = vector.broadcast %421 : f32 to vector<8x128xf32>
    %423 = arith.addf %420, %422 : vector<8x128xf32>
    %cst_106 = arith.constant 0.000000e+00 : f32
    %424 = vector.broadcast %cst_106 : f32 to vector<8x128xf32>
    %425 = arith.maximumf %423, %424 : vector<8x128xf32>
    %c34_107 = arith.constant 34 : index
    %426 = memref.load %arg4[%c34_107] : memref<50xf32, #tpu.memory_space<smem>>
    %427 = vector.broadcast %426 : f32 to vector<8x128xf32>
    %428 = arith.mulf %425, %427 : vector<8x128xf32>
    %429 = arith.addf %417, %428 : vector<8x128xf32>
    %c35 = arith.constant 35 : index
    %430 = memref.load %arg2[%c35] : memref<50xf32, #tpu.memory_space<smem>>
    %431 = vector.broadcast %430 : f32 to vector<8x128xf32>
    %432 = arith.mulf %6, %431 : vector<8x128xf32>
    %c35_108 = arith.constant 35 : index
    %433 = memref.load %arg3[%c35_108] : memref<50xf32, #tpu.memory_space<smem>>
    %434 = vector.broadcast %433 : f32 to vector<8x128xf32>
    %435 = arith.addf %432, %434 : vector<8x128xf32>
    %cst_109 = arith.constant 0.000000e+00 : f32
    %436 = vector.broadcast %cst_109 : f32 to vector<8x128xf32>
    %437 = arith.maximumf %435, %436 : vector<8x128xf32>
    %c35_110 = arith.constant 35 : index
    %438 = memref.load %arg4[%c35_110] : memref<50xf32, #tpu.memory_space<smem>>
    %439 = vector.broadcast %438 : f32 to vector<8x128xf32>
    %440 = arith.mulf %437, %439 : vector<8x128xf32>
    %441 = arith.addf %429, %440 : vector<8x128xf32>
    %c36 = arith.constant 36 : index
    %442 = memref.load %arg2[%c36] : memref<50xf32, #tpu.memory_space<smem>>
    %443 = vector.broadcast %442 : f32 to vector<8x128xf32>
    %444 = arith.mulf %6, %443 : vector<8x128xf32>
    %c36_111 = arith.constant 36 : index
    %445 = memref.load %arg3[%c36_111] : memref<50xf32, #tpu.memory_space<smem>>
    %446 = vector.broadcast %445 : f32 to vector<8x128xf32>
    %447 = arith.addf %444, %446 : vector<8x128xf32>
    %cst_112 = arith.constant 0.000000e+00 : f32
    %448 = vector.broadcast %cst_112 : f32 to vector<8x128xf32>
    %449 = arith.maximumf %447, %448 : vector<8x128xf32>
    %c36_113 = arith.constant 36 : index
    %450 = memref.load %arg4[%c36_113] : memref<50xf32, #tpu.memory_space<smem>>
    %451 = vector.broadcast %450 : f32 to vector<8x128xf32>
    %452 = arith.mulf %449, %451 : vector<8x128xf32>
    %453 = arith.addf %441, %452 : vector<8x128xf32>
    %c37 = arith.constant 37 : index
    %454 = memref.load %arg2[%c37] : memref<50xf32, #tpu.memory_space<smem>>
    %455 = vector.broadcast %454 : f32 to vector<8x128xf32>
    %456 = arith.mulf %6, %455 : vector<8x128xf32>
    %c37_114 = arith.constant 37 : index
    %457 = memref.load %arg3[%c37_114] : memref<50xf32, #tpu.memory_space<smem>>
    %458 = vector.broadcast %457 : f32 to vector<8x128xf32>
    %459 = arith.addf %456, %458 : vector<8x128xf32>
    %cst_115 = arith.constant 0.000000e+00 : f32
    %460 = vector.broadcast %cst_115 : f32 to vector<8x128xf32>
    %461 = arith.maximumf %459, %460 : vector<8x128xf32>
    %c37_116 = arith.constant 37 : index
    %462 = memref.load %arg4[%c37_116] : memref<50xf32, #tpu.memory_space<smem>>
    %463 = vector.broadcast %462 : f32 to vector<8x128xf32>
    %464 = arith.mulf %461, %463 : vector<8x128xf32>
    %465 = arith.addf %453, %464 : vector<8x128xf32>
    %c38 = arith.constant 38 : index
    %466 = memref.load %arg2[%c38] : memref<50xf32, #tpu.memory_space<smem>>
    %467 = vector.broadcast %466 : f32 to vector<8x128xf32>
    %468 = arith.mulf %6, %467 : vector<8x128xf32>
    %c38_117 = arith.constant 38 : index
    %469 = memref.load %arg3[%c38_117] : memref<50xf32, #tpu.memory_space<smem>>
    %470 = vector.broadcast %469 : f32 to vector<8x128xf32>
    %471 = arith.addf %468, %470 : vector<8x128xf32>
    %cst_118 = arith.constant 0.000000e+00 : f32
    %472 = vector.broadcast %cst_118 : f32 to vector<8x128xf32>
    %473 = arith.maximumf %471, %472 : vector<8x128xf32>
    %c38_119 = arith.constant 38 : index
    %474 = memref.load %arg4[%c38_119] : memref<50xf32, #tpu.memory_space<smem>>
    %475 = vector.broadcast %474 : f32 to vector<8x128xf32>
    %476 = arith.mulf %473, %475 : vector<8x128xf32>
    %477 = arith.addf %465, %476 : vector<8x128xf32>
    %c39 = arith.constant 39 : index
    %478 = memref.load %arg2[%c39] : memref<50xf32, #tpu.memory_space<smem>>
    %479 = vector.broadcast %478 : f32 to vector<8x128xf32>
    %480 = arith.mulf %6, %479 : vector<8x128xf32>
    %c39_120 = arith.constant 39 : index
    %481 = memref.load %arg3[%c39_120] : memref<50xf32, #tpu.memory_space<smem>>
    %482 = vector.broadcast %481 : f32 to vector<8x128xf32>
    %483 = arith.addf %480, %482 : vector<8x128xf32>
    %cst_121 = arith.constant 0.000000e+00 : f32
    %484 = vector.broadcast %cst_121 : f32 to vector<8x128xf32>
    %485 = arith.maximumf %483, %484 : vector<8x128xf32>
    %c39_122 = arith.constant 39 : index
    %486 = memref.load %arg4[%c39_122] : memref<50xf32, #tpu.memory_space<smem>>
    %487 = vector.broadcast %486 : f32 to vector<8x128xf32>
    %488 = arith.mulf %485, %487 : vector<8x128xf32>
    %489 = arith.addf %477, %488 : vector<8x128xf32>
    %c40 = arith.constant 40 : index
    %490 = memref.load %arg2[%c40] : memref<50xf32, #tpu.memory_space<smem>>
    %491 = vector.broadcast %490 : f32 to vector<8x128xf32>
    %492 = arith.mulf %6, %491 : vector<8x128xf32>
    %c40_123 = arith.constant 40 : index
    %493 = memref.load %arg3[%c40_123] : memref<50xf32, #tpu.memory_space<smem>>
    %494 = vector.broadcast %493 : f32 to vector<8x128xf32>
    %495 = arith.addf %492, %494 : vector<8x128xf32>
    %cst_124 = arith.constant 0.000000e+00 : f32
    %496 = vector.broadcast %cst_124 : f32 to vector<8x128xf32>
    %497 = arith.maximumf %495, %496 : vector<8x128xf32>
    %c40_125 = arith.constant 40 : index
    %498 = memref.load %arg4[%c40_125] : memref<50xf32, #tpu.memory_space<smem>>
    %499 = vector.broadcast %498 : f32 to vector<8x128xf32>
    %500 = arith.mulf %497, %499 : vector<8x128xf32>
    %501 = arith.addf %489, %500 : vector<8x128xf32>
    %c41 = arith.constant 41 : index
    %502 = memref.load %arg2[%c41] : memref<50xf32, #tpu.memory_space<smem>>
    %503 = vector.broadcast %502 : f32 to vector<8x128xf32>
    %504 = arith.mulf %6, %503 : vector<8x128xf32>
    %c41_126 = arith.constant 41 : index
    %505 = memref.load %arg3[%c41_126] : memref<50xf32, #tpu.memory_space<smem>>
    %506 = vector.broadcast %505 : f32 to vector<8x128xf32>
    %507 = arith.addf %504, %506 : vector<8x128xf32>
    %cst_127 = arith.constant 0.000000e+00 : f32
    %508 = vector.broadcast %cst_127 : f32 to vector<8x128xf32>
    %509 = arith.maximumf %507, %508 : vector<8x128xf32>
    %c41_128 = arith.constant 41 : index
    %510 = memref.load %arg4[%c41_128] : memref<50xf32, #tpu.memory_space<smem>>
    %511 = vector.broadcast %510 : f32 to vector<8x128xf32>
    %512 = arith.mulf %509, %511 : vector<8x128xf32>
    %513 = arith.addf %501, %512 : vector<8x128xf32>
    %c42 = arith.constant 42 : index
    %514 = memref.load %arg2[%c42] : memref<50xf32, #tpu.memory_space<smem>>
    %515 = vector.broadcast %514 : f32 to vector<8x128xf32>
    %516 = arith.mulf %6, %515 : vector<8x128xf32>
    %c42_129 = arith.constant 42 : index
    %517 = memref.load %arg3[%c42_129] : memref<50xf32, #tpu.memory_space<smem>>
    %518 = vector.broadcast %517 : f32 to vector<8x128xf32>
    %519 = arith.addf %516, %518 : vector<8x128xf32>
    %cst_130 = arith.constant 0.000000e+00 : f32
    %520 = vector.broadcast %cst_130 : f32 to vector<8x128xf32>
    %521 = arith.maximumf %519, %520 : vector<8x128xf32>
    %c42_131 = arith.constant 42 : index
    %522 = memref.load %arg4[%c42_131] : memref<50xf32, #tpu.memory_space<smem>>
    %523 = vector.broadcast %522 : f32 to vector<8x128xf32>
    %524 = arith.mulf %521, %523 : vector<8x128xf32>
    %525 = arith.addf %513, %524 : vector<8x128xf32>
    %c43 = arith.constant 43 : index
    %526 = memref.load %arg2[%c43] : memref<50xf32, #tpu.memory_space<smem>>
    %527 = vector.broadcast %526 : f32 to vector<8x128xf32>
    %528 = arith.mulf %6, %527 : vector<8x128xf32>
    %c43_132 = arith.constant 43 : index
    %529 = memref.load %arg3[%c43_132] : memref<50xf32, #tpu.memory_space<smem>>
    %530 = vector.broadcast %529 : f32 to vector<8x128xf32>
    %531 = arith.addf %528, %530 : vector<8x128xf32>
    %cst_133 = arith.constant 0.000000e+00 : f32
    %532 = vector.broadcast %cst_133 : f32 to vector<8x128xf32>
    %533 = arith.maximumf %531, %532 : vector<8x128xf32>
    %c43_134 = arith.constant 43 : index
    %534 = memref.load %arg4[%c43_134] : memref<50xf32, #tpu.memory_space<smem>>
    %535 = vector.broadcast %534 : f32 to vector<8x128xf32>
    %536 = arith.mulf %533, %535 : vector<8x128xf32>
    %537 = arith.addf %525, %536 : vector<8x128xf32>
    %c44 = arith.constant 44 : index
    %538 = memref.load %arg2[%c44] : memref<50xf32, #tpu.memory_space<smem>>
    %539 = vector.broadcast %538 : f32 to vector<8x128xf32>
    %540 = arith.mulf %6, %539 : vector<8x128xf32>
    %c44_135 = arith.constant 44 : index
    %541 = memref.load %arg3[%c44_135] : memref<50xf32, #tpu.memory_space<smem>>
    %542 = vector.broadcast %541 : f32 to vector<8x128xf32>
    %543 = arith.addf %540, %542 : vector<8x128xf32>
    %cst_136 = arith.constant 0.000000e+00 : f32
    %544 = vector.broadcast %cst_136 : f32 to vector<8x128xf32>
    %545 = arith.maximumf %543, %544 : vector<8x128xf32>
    %c44_137 = arith.constant 44 : index
    %546 = memref.load %arg4[%c44_137] : memref<50xf32, #tpu.memory_space<smem>>
    %547 = vector.broadcast %546 : f32 to vector<8x128xf32>
    %548 = arith.mulf %545, %547 : vector<8x128xf32>
    %549 = arith.addf %537, %548 : vector<8x128xf32>
    %c45 = arith.constant 45 : index
    %550 = memref.load %arg2[%c45] : memref<50xf32, #tpu.memory_space<smem>>
    %551 = vector.broadcast %550 : f32 to vector<8x128xf32>
    %552 = arith.mulf %6, %551 : vector<8x128xf32>
    %c45_138 = arith.constant 45 : index
    %553 = memref.load %arg3[%c45_138] : memref<50xf32, #tpu.memory_space<smem>>
    %554 = vector.broadcast %553 : f32 to vector<8x128xf32>
    %555 = arith.addf %552, %554 : vector<8x128xf32>
    %cst_139 = arith.constant 0.000000e+00 : f32
    %556 = vector.broadcast %cst_139 : f32 to vector<8x128xf32>
    %557 = arith.maximumf %555, %556 : vector<8x128xf32>
    %c45_140 = arith.constant 45 : index
    %558 = memref.load %arg4[%c45_140] : memref<50xf32, #tpu.memory_space<smem>>
    %559 = vector.broadcast %558 : f32 to vector<8x128xf32>
    %560 = arith.mulf %557, %559 : vector<8x128xf32>
    %561 = arith.addf %549, %560 : vector<8x128xf32>
    %c46 = arith.constant 46 : index
    %562 = memref.load %arg2[%c46] : memref<50xf32, #tpu.memory_space<smem>>
    %563 = vector.broadcast %562 : f32 to vector<8x128xf32>
    %564 = arith.mulf %6, %563 : vector<8x128xf32>
    %c46_141 = arith.constant 46 : index
    %565 = memref.load %arg3[%c46_141] : memref<50xf32, #tpu.memory_space<smem>>
    %566 = vector.broadcast %565 : f32 to vector<8x128xf32>
    %567 = arith.addf %564, %566 : vector<8x128xf32>
    %cst_142 = arith.constant 0.000000e+00 : f32
    %568 = vector.broadcast %cst_142 : f32 to vector<8x128xf32>
    %569 = arith.maximumf %567, %568 : vector<8x128xf32>
    %c46_143 = arith.constant 46 : index
    %570 = memref.load %arg4[%c46_143] : memref<50xf32, #tpu.memory_space<smem>>
    %571 = vector.broadcast %570 : f32 to vector<8x128xf32>
    %572 = arith.mulf %569, %571 : vector<8x128xf32>
    %573 = arith.addf %561, %572 : vector<8x128xf32>
    %c47 = arith.constant 47 : index
    %574 = memref.load %arg2[%c47] : memref<50xf32, #tpu.memory_space<smem>>
    %575 = vector.broadcast %574 : f32 to vector<8x128xf32>
    %576 = arith.mulf %6, %575 : vector<8x128xf32>
    %c47_144 = arith.constant 47 : index
    %577 = memref.load %arg3[%c47_144] : memref<50xf32, #tpu.memory_space<smem>>
    %578 = vector.broadcast %577 : f32 to vector<8x128xf32>
    %579 = arith.addf %576, %578 : vector<8x128xf32>
    %cst_145 = arith.constant 0.000000e+00 : f32
    %580 = vector.broadcast %cst_145 : f32 to vector<8x128xf32>
    %581 = arith.maximumf %579, %580 : vector<8x128xf32>
    %c47_146 = arith.constant 47 : index
    %582 = memref.load %arg4[%c47_146] : memref<50xf32, #tpu.memory_space<smem>>
    %583 = vector.broadcast %582 : f32 to vector<8x128xf32>
    %584 = arith.mulf %581, %583 : vector<8x128xf32>
    %585 = arith.addf %573, %584 : vector<8x128xf32>
    %c48 = arith.constant 48 : index
    %586 = memref.load %arg2[%c48] : memref<50xf32, #tpu.memory_space<smem>>
    %587 = vector.broadcast %586 : f32 to vector<8x128xf32>
    %588 = arith.mulf %6, %587 : vector<8x128xf32>
    %c48_147 = arith.constant 48 : index
    %589 = memref.load %arg3[%c48_147] : memref<50xf32, #tpu.memory_space<smem>>
    %590 = vector.broadcast %589 : f32 to vector<8x128xf32>
    %591 = arith.addf %588, %590 : vector<8x128xf32>
    %cst_148 = arith.constant 0.000000e+00 : f32
    %592 = vector.broadcast %cst_148 : f32 to vector<8x128xf32>
    %593 = arith.maximumf %591, %592 : vector<8x128xf32>
    %c48_149 = arith.constant 48 : index
    %594 = memref.load %arg4[%c48_149] : memref<50xf32, #tpu.memory_space<smem>>
    %595 = vector.broadcast %594 : f32 to vector<8x128xf32>
    %596 = arith.mulf %593, %595 : vector<8x128xf32>
    %597 = arith.addf %585, %596 : vector<8x128xf32>
    %c49 = arith.constant 49 : index
    %598 = memref.load %arg2[%c49] : memref<50xf32, #tpu.memory_space<smem>>
    %599 = vector.broadcast %598 : f32 to vector<8x128xf32>
    %600 = arith.mulf %6, %599 : vector<8x128xf32>
    %c49_150 = arith.constant 49 : index
    %601 = memref.load %arg3[%c49_150] : memref<50xf32, #tpu.memory_space<smem>>
    %602 = vector.broadcast %601 : f32 to vector<8x128xf32>
    %603 = arith.addf %600, %602 : vector<8x128xf32>
    %cst_151 = arith.constant 0.000000e+00 : f32
    %604 = vector.broadcast %cst_151 : f32 to vector<8x128xf32>
    %605 = arith.maximumf %603, %604 : vector<8x128xf32>
    %c49_152 = arith.constant 49 : index
    %606 = memref.load %arg4[%c49_152] : memref<50xf32, #tpu.memory_space<smem>>
    %607 = vector.broadcast %606 : f32 to vector<8x128xf32>
    %608 = arith.mulf %605, %607 : vector<8x128xf32>
    %609 = arith.addf %597, %608 : vector<8x128xf32>
    %610 = arith.index_cast %4 : i32 to index
    %c0_153 = arith.constant 0 : index
    %611 = vector.load %arg6[%610, %c0_153] : memref<8x128xf32, #tpu.memory_space<vmem>>, vector<8x128xf32>
    tpu.vector_store %arg6[%610, %c0_153], %609 {strides = array<i32>} : memref<8x128xf32, #tpu.memory_space<vmem>>, vector<8x128xf32>,
    %c1_i32_154 = arith.constant 1 : i32
    return
  }
  func.func @transform_0(%arg0: i32) -> (i32, i32) {
    %c0_i32 = arith.constant 0 : i32
    %c0_i32_0 = arith.constant 0 : i32
    return %arg0, %c0_i32 : i32, i32
  }
  func.func @transform_1(%arg0: i32) -> i32 {
    %c0_i32 = arith.constant 0 : i32
    %c0_i32_0 = arith.constant 0 : i32
    return %c0_i32 : i32
  }
  func.func @transform_2(%arg0: i32) -> i32 {
    %c0_i32 = arith.constant 0 : i32
    %c0_i32_0 = arith.constant 0 : i32
    return %c0_i32 : i32
  }
  func.func @transform_3(%arg0: i32) -> i32 {
    %c0_i32 = arith.constant 0 : i32
    %c0_i32_0 = arith.constant 0 : i32
    return %c0_i32 : i32
  }
  func.func @transform_4(%arg0: i32) -> i32 {
    %c0_i32 = arith.constant 0 : i32
    %c0_i32_0 = arith.constant 0 : i32
    return %c0_i32 : i32
  }
  func.func @transform_5(%arg0: i32) -> (i32, i32) {
    %c0_i32 = arith.constant 0 : i32
    %c0_i32_0 = arith.constant 0 : i32
    return %arg0, %c0_i32 : i32, i32
  }
}

</mosaic_0001>

<llo_original>
// kernel: tpu_custom_call.1
$region0: #{tpu_custom_call.1}
  #allocation0 [shape = 'u32[]', space=smem, size = 0x4, offset = 0x4, fixed_abs, tag = 'smem constant byte address 0x4 - core index']
  #allocation1 [shape = 'u32[144,128]{1,0:T(1,128)}', space=vmem, size = 0x12000, scoped, tag = 'internal scratch']
  #allocation2 [shape = 'f32[1]{0:T(128)S(6)}', space=smem, size = 0x200, scoped, tag = 'scoped memory for tpu_custom_call.1']
  %s0 = inlined_call_operand.hbm [shape: f32[8,128], index: 0, kind: input, shape index: {}]
  %s1 = inlined_call_operand.vmem [shape: f32[50], index: 1, kind: input, shape index: {}]
  %s2 = inlined_call_operand.vmem [shape: f32[50], index: 2, kind: input, shape index: {}]
  %s3 = inlined_call_operand.vmem [shape: f32[50], index: 3, kind: input, shape index: {}]
  %s4 = inlined_call_operand.<no memory space> [shape: f32[1], index: 4, kind: input, shape index: {}]
  %s5 = inlined_call_operand.hbm [shape: f32[8,128], index: 5, kind: output, shape index: {}]
  %s6 = sld [smem:[#allocation0]]
  $region46: #{tpu_custom_call.1} parent=0
    _
  %s8 = ssub.s32 1, %s6
  %s9 = scalar_select 0, %s8, %s6
  %10 = sst [smem:[#allocation2]] %s4
  $region1: #{tpu_custom_call.1} parent=0
    #allocation3 [shape = 'u8[4096]{0}', space=vmem, size = 0x1000, scoped, tag = 'input window, operand 0, single buffered']
    #allocation4 [shape = 's32[1]{0}', space=sflag, size = 0x4, scoped, tag = 'scoped memory for tpu_custom_call.1']
    #allocation5 [shape = 's32[1]{0}', space=sflag, size = 0x4, scoped, tag = 'scoped memory for tpu_custom_call.1']
    #allocation6 [shape = 's32[1]{0}', space=sflag, size = 0x4, scoped, tag = 'scoped memory for tpu_custom_call.1']
    #allocation7 [shape = 'u8[512]{0}', space=smem, size = 0x200, scoped, tag = 'input window, operand 1, single buffered']
    #allocation8 [shape = 'u8[512]{0}', space=smem, size = 0x200, scoped, tag = 'input window, operand 2, single buffered']
    #allocation9 [shape = 's32[1]{0}', space=sflag, size = 0x4, scoped, tag = 'scoped memory for tpu_custom_call.1']
    #allocation10 [shape = 'u8[512]{0}', space=smem, size = 0x200, scoped, tag = 'input window, operand 3, single buffered']
    #allocation11 [shape = 'u8[4096]{0}', space=vmem, size = 0x1000, scoped, tag = 'output window, operand 0, single buffered']
    %11 = vsyncpa [#allocation4], 0
    %12 = vsyncpa [#allocation6], 0
    %13 = vsyncpa [#allocation9], 0
    %14 = vsyncpa [#allocation5], 0
    // Predicated region
    $region2: #{tpu_custom_call.1} parent=1 // pred_check
      _
    $region3: #{tpu_custom_call.1} parent=1 // pred_check_branch
      %16 = sbr.rel (0) target = $region5
    $region4: #{tpu_custom_call.1} parent=1 // pred_region
      %s18 = ssub.s32 128, 128
      %19 = vsyncadd [#allocation4], %s18
      %s21 = sshll.u32 [#allocation3], 4
      %s22 = int_to_ptr.vmem [resolvable:$true] %s21
      %24 = dma.hbm_to_vmem [thread:$0]  %s0, 128, %s22, [#allocation4]
    $region5: #{tpu_custom_call.1} parent=1 // pred_fallthru
      _
    // Predicated region
    $region6: #{tpu_custom_call.1} parent=1 // pred_check
      _
    $region7: #{tpu_custom_call.1} parent=1 // pred_check_branch
      %26 = sbr.rel (0) target = $region9
    $region8: #{tpu_custom_call.1} parent=1 // pred_region
      %s28 = ssub.s32 16, 16
      %29 = vsyncadd [#allocation6], %s28
      %s31 = sshll.u32 %s1, 4
      %s32 = int_to_ptr.vmem [resolvable:$true] %s31
      %34 = dma.vmem_to_smem %s32, 16, [#allocation7], [#allocation6]
    $region9: #{tpu_custom_call.1} parent=1 // pred_fallthru
      _
    // Predicated region
    $region10: #{tpu_custom_call.1} parent=1 // pred_check
      _
    $region11: #{tpu_custom_call.1} parent=1 // pred_check_branch
      %36 = sbr.rel (0) target = $region13
    $region12: #{tpu_custom_call.1} parent=1 // pred_region
      %s38 = ssub.s32 16, 16
      %39 = vsyncadd [#allocation9], %s38
      %s41 = sshll.u32 %s2, 4
      %s42 = int_to_ptr.vmem [resolvable:$true] %s41
      %44 = dma.vmem_to_smem %s42, 16, [#allocation8], [#allocation9]
    $region13: #{tpu_custom_call.1} parent=1 // pred_fallthru
      _
    // Predicated region
    $region14: #{tpu_custom_call.1} parent=1 // pred_check
      _
    $region15: #{tpu_custom_call.1} parent=1 // pred_check_branch
      %46 = sbr.rel (0) target = $region17
    $region16: #{tpu_custom_call.1} parent=1 // pred_region
      %s48 = ssub.s32 16, 16
      %49 = vsyncadd [#allocation9], %s48
      %s51 = sshll.u32 %s3, 4
      %s52 = int_to_ptr.vmem [resolvable:$true] %s51
      %54 = dma.vmem_to_smem %s52, 16, [#allocation10], [#allocation9]
    $region17: #{tpu_custom_call.1} parent=1 // pred_fallthru
      _
    // Predicated region
    $region18: #{tpu_custom_call.1} parent=1 // pred_check
      _
    $region19: #{tpu_custom_call.1} parent=1 // pred_check_branch
      %56 = sbr.rel (0) target = $region21
    $region20: #{tpu_custom_call.1} parent=1 // pred_region
      _
    $region21: #{tpu_custom_call.1} parent=1 // pred_fallthru
      _
    // Predicated region
    $region22: #{tpu_custom_call.1} parent=1 // pred_check
      _
    $region23: #{tpu_custom_call.1} parent=1 // pred_check_branch
      %58 = sbr.rel (0) target = $region25
    $region24: #{tpu_custom_call.1} parent=1 // pred_region
      %59 = dma.done [#allocation4], 128
    $region25: #{tpu_custom_call.1} parent=1 // pred_fallthru
      _
    // Predicated region
    $region26: #{tpu_custom_call.1} parent=1 // pred_check
      _
    $region27: #{tpu_custom_call.1} parent=1 // pred_check_branch
      %61 = sbr.rel (0) target = $region29
    $region28: #{tpu_custom_call.1} parent=1 // pred_region
      %62 = dma.done [#allocation6], 16
    $region29: #{tpu_custom_call.1} parent=1 // pred_fallthru
      _
    // Predicated region
    $region30: #{tpu_custom_call.1} parent=1 // pred_check
      _
    $region31: #{tpu_custom_call.1} parent=1 // pred_check_branch
      %64 = sbr.rel (0) target = $region33
    $region32: #{tpu_custom_call.1} parent=1 // pred_region
      %65 = dma.done [#allocation9], 16
    $region33: #{tpu_custom_call.1} parent=1 // pred_fallthru
      _
    // Predicated region
    $region34: #{tpu_custom_call.1} parent=1 // pred_check
      _
    $region35: #{tpu_custom_call.1} parent=1 // pred_check_branch
      %67 = sbr.rel (0) target = $region37
    $region36: #{tpu_custom_call.1} parent=1 // pred_region
      %68 = dma.done [#allocation9], 16
    $region37: #{tpu_custom_call.1} parent=1 // pred_fallthru
      _
    %69 = sfence
    %s70 = sld [smem:[#allocation2]]
    %v71 = vld [vmem:[#allocation3] sm:$0xff]
    %v72 = vstv %s70
    %v73 = vadd.f32 %v72, 0.0
    %s74 = sld [smem:[#allocation7]]
    %v75 = vstv %s74
    %v76 = vmul.f32 %v71, %v75
    %s77 = sld [smem:[#allocation8]]
    %v78 = vstv %s77
    %v79 = vadd.f32 %v76, %v78
    %v80 = vmax.f32 %v79, 0.0
    %s81 = sld [smem:[#allocation10]]
    %v82 = vstv %s81
    %v83 = vmul.f32 %v80, %v82
    %v84 = vadd.f32 %v73, %v83
    %s85 = sld [smem:[#allocation7 + $0x1]]
    %v86 = vstv %s85
    %v87 = vmul.f32 %v71, %v86
    %s88 = sld [smem:[#allocation8 + $0x1]]
    %v89 = vstv %s88
    %v90 = vadd.f32 %v87, %v89
    %v91 = vmax.f32 %v90, 0.0
    %s92 = sld [smem:[#allocation10 + $0x1]]
    %v93 = vstv %s92
    %v94 = vmul.f32 %v91, %v93
    %v95 = vadd.f32 %v84, %v94
    %s96 = sld [smem:[#allocation7 + $0x2]]
    %v97 = vstv %s96
    %v98 = vmul.f32 %v71, %v97
    %s99 = sld [smem:[#allocation8 + $0x2]]
    %v100 = vstv %s99
    %v101 = vadd.f32 %v98, %v100
    %v102 = vmax.f32 %v101, 0.0
    %s103 = sld [smem:[#allocation10 + $0x2]]
    %v104 = vstv %s103
    %v105 = vmul.f32 %v102, %v104
    %v106 = vadd.f32 %v95, %v105
    %s107 = sld [smem:[#allocation7 + $0x3]]
    %v108 = vstv %s107
    %v109 = vmul.f32 %v71, %v108
    %s110 = sld [smem:[#allocation8 + $0x3]]
    %v111 = vstv %s110
    %v112 = vadd.f32 %v109, %v111
    %v113 = vmax.f32 %v112, 0.0
    %s114 = sld [smem:[#allocation10 + $0x3]]
    %v115 = vstv %s114
    %v116 = vmul.f32 %v113, %v115
    %v117 = vadd.f32 %v106, %v116
    %s118 = sld [smem:[#allocation7 + $0x4]]
    %v119 = vstv %s118
    %v120 = vmul.f32 %v71, %v119
    %s121 = sld [smem:[#allocation8 + $0x4]]
    %v122 = vstv %s121
    %v123 = vadd.f32 %v120, %v122
    %v124 = vmax.f32 %v123, 0.0
    %s125 = sld [smem:[#allocation10 + $0x4]]
    %v126 = vstv %s125
    %v127 = vmul.f32 %v124, %v126
    %v128 = vadd.f32 %v117, %v127
    %s129 = sld [smem:[#allocation7 + $0x5]]
    %v130 = vstv %s129
    %v131 = vmul.f32 %v71, %v130
    %s132 = sld [smem:[#allocation8 + $0x5]]
    %v133 = vstv %s132
    %v134 = vadd.f32 %v131, %v133
    %v135 = vmax.f32 %v134, 0.0
    %s136 = sld [smem:[#allocation10 + $0x5]]
    %v137 = vstv %s136
    %v138 = vmul.f32 %v135, %v137
    %v139 = vadd.f32 %v128, %v138
    %s140 = sld [smem:[#allocation7 + $0x6]]
    %v141 = vstv %s140
    %v142 = vmul.f32 %v71, %v141
    %s143 = sld [smem:[#allocation8 + $0x6]]
    %v144 = vstv %s143
    %v145 = vadd.f32 %v142, %v144
    %v146 = vmax.f32 %v145, 0.0
    %s147 = sld [smem:[#allocation10 + $0x6]]
    %v148 = vstv %s147
    %v149 = vmul.f32 %v146, %v148
    %v150 = vadd.f32 %v139, %v149
    %s151 = sld [smem:[#allocation7 + $0x7]]
    %v152 = vstv %s151
    %v153 = vmul.f32 %v71, %v152
    %s154 = sld [smem:[#allocation8 + $0x7]]
    %v155 = vstv %s154
    %v156 = vadd.f32 %v153, %v155
    %v157 = vmax.f32 %v156, 0.0
    %s158 = sld [smem:[#allocation10 + $0x7]]
    %v159 = vstv %s158
    %v160 = vmul.f32 %v157, %v159
    %v161 = vadd.f32 %v150, %v160
    %s162 = sld [smem:[#allocation7 + $0x8]]
    %v163 = vstv %s162
    %v164 = vmul.f32 %v71, %v163
    %s165 = sld [smem:[#allocation8 + $0x8]]
    %v166 = vstv %s165
    %v167 = vadd.f32 %v164, %v166
    %v168 = vmax.f32 %v167, 0.0
    %s169 = sld [smem:[#allocation10 + $0x8]]
    %v170 = vstv %s169
    %v171 = vmul.f32 %v168, %v170
    %v172 = vadd.f32 %v161, %v171
    %s173 = sld [smem:[#allocation7 + $0x9]]
    %v174 = vstv %s173
    %v175 = vmul.f32 %v71, %v174
    %s176 = sld [smem:[#allocation8 + $0x9]]
    %v177 = vstv %s176
    %v178 = vadd.f32 %v175, %v177
    %v179 = vmax.f32 %v178, 0.0
    %s180 = sld [smem:[#allocation10 + $0x9]]
    %v181 = vstv %s180
    %v182 = vmul.f32 %v179, %v181
    %v183 = vadd.f32 %v172, %v182
    %s184 = sld [smem:[#allocation7 + $0xa]]
    %v185 = vstv %s184
    %v186 = vmul.f32 %v71, %v185
    %s187 = sld [smem:[#allocation8 + $0xa]]
    %v188 = vstv %s187
    %v189 = vadd.f32 %v186, %v188
    %v190 = vmax.f32 %v189, 0.0
    %s191 = sld [smem:[#allocation10 + $0xa]]
    %v192 = vstv %s191
    %v193 = vmul.f32 %v190, %v192
    %v194 = vadd.f32 %v183, %v193
    %s195 = sld [smem:[#allocation7 + $0xb]]
    %v196 = vstv %s195
    %v197 = vmul.f32 %v71, %v196
    %s198 = sld [smem:[#allocation8 + $0xb]]
    %v199 = vstv %s198
    %v200 = vadd.f32 %v197, %v199
    %v201 = vmax.f32 %v200, 0.0
    %s202 = sld [smem:[#allocation10 + $0xb]]
    %v203 = vstv %s202
    %v204 = vmul.f32 %v201, %v203
    %v205 = vadd.f32 %v194, %v204
    %s206 = sld [smem:[#allocation7 + $0xc]]
    %v207 = vstv %s206
    %v208 = vmul.f32 %v71, %v207
    %s209 = sld [smem:[#allocation8 + $0xc]]
    %v210 = vstv %s209
    %v211 = vadd.f32 %v208, %v210
    %v212 = vmax.f32 %v211, 0.0
    %s213 = sld [smem:[#allocation10 + $0xc]]
    %v214 = vstv %s213
    %v215 = vmul.f32 %v212, %v214
    %v216 = vadd.f32 %v205, %v215
    %s217 = sld [smem:[#allocation7 + $0xd]]
    %v218 = vstv %s217
    %v219 = vmul.f32 %v71, %v218
    %s220 = sld [smem:[#allocation8 + $0xd]]
    %v221 = vstv %s220
    %v222 = vadd.f32 %v219, %v221
    %v223 = vmax.f32 %v222, 0.0
    %s224 = sld [smem:[#allocation10 + $0xd]]
    %v225 = vstv %s224
    %v226 = vmul.f32 %v223, %v225
    %v227 = vadd.f32 %v216, %v226
    %s228 = sld [smem:[#allocation7 + $0xe]]
    %v229 = vstv %s228
    %v230 = vmul.f32 %v71, %v229
    %s231 = sld [smem:[#allocation8 + $0xe]]
    %v232 = vstv %s231
    %v233 = vadd.f32 %v230, %v232
    %v234 = vmax.f32 %v233, 0.0
    %s235 = sld [smem:[#allocation10 + $0xe]]
    %v236 = vstv %s235
    %v237 = vmul.f32 %v234, %v236
    %v238 = vadd.f32 %v227, %v237
    %s239 = sld [smem:[#allocation7 + $0xf]]
    %v240 = vstv %s239
    %v241 = vmul.f32 %v71, %v240
    %s242 = sld [smem:[#allocation8 + $0xf]]
    %v243 = vstv %s242
    %v244 = vadd.f32 %v241, %v243
    %v245 = vmax.f32 %v244, 0.0
    %s246 = sld [smem:[#allocation10 + $0xf]]
    %v247 = vstv %s246
    %v248 = vmul.f32 %v245, %v247
    %v249 = vadd.f32 %v238, %v248
    %s250 = sld [smem:[#allocation7 + $0x10]]
    %v251 = vstv %s250
    %v252 = vmul.f32 %v71, %v251
    %s253 = sld [smem:[#allocation8 + $0x10]]
    %v254 = vstv %s253
    %v255 = vadd.f32 %v252, %v254
    %v256 = vmax.f32 %v255, 0.0
    %s257 = sld [smem:[#allocation10 + $0x10]]
    %v258 = vstv %s257
    %v259 = vmul.f32 %v256, %v258
    %v260 = vadd.f32 %v249, %v259
    %s261 = sld [smem:[#allocation7 + $0x11]]
    %v262 = vstv %s261
    %v263 = vmul.f32 %v71, %v262
    %s264 = sld [smem:[#allocation8 + $0x11]]
    %v265 = vstv %s264
    %v266 = vadd.f32 %v263, %v265
    %v267 = vmax.f32 %v266, 0.0
    %s268 = sld [smem:[#allocation10 + $0x11]]
    %v269 = vstv %s268
    %v270 = vmul.f32 %v267, %v269
    %v271 = vadd.f32 %v260, %v270
    %s272 = sld [smem:[#allocation7 + $0x12]]
    %v273 = vstv %s272
    %v274 = vmul.f32 %v71, %v273
    %s275 = sld [smem:[#allocation8 + $0x12]]
    %v276 = vstv %s275
    %v277 = vadd.f32 %v274, %v276
    %v278 = vmax.f32 %v277, 0.0
    %s279 = sld [smem:[#allocation10 + $0x12]]
    %v280 = vstv %s279
    %v281 = vmul.f32 %v278, %v280
    %v282 = vadd.f32 %v271, %v281
    %s283 = sld [smem:[#allocation7 + $0x13]]
    %v284 = vstv %s283
    %v285 = vmul.f32 %v71, %v284
    %s286 = sld [smem:[#allocation8 + $0x13]]
    %v287 = vstv %s286
    %v288 = vadd.f32 %v285, %v287
    %v289 = vmax.f32 %v288, 0.0
    %s290 = sld [smem:[#allocation10 + $0x13]]
    %v291 = vstv %s290
    %v292 = vmul.f32 %v289, %v291
    %v293 = vadd.f32 %v282, %v292
    %s294 = sld [smem:[#allocation7 + $0x14]]
    %v295 = vstv %s294
    %v296 = vmul.f32 %v71, %v295
    %s297 = sld [smem:[#allocation8 + $0x14]]
    %v298 = vstv %s297
    %v299 = vadd.f32 %v296, %v298
    %v300 = vmax.f32 %v299, 0.0
    %s301 = sld [smem:[#allocation10 + $0x14]]
    %v302 = vstv %s301
    %v303 = vmul.f32 %v300, %v302
    %v304 = vadd.f32 %v293, %v303
    %s305 = sld [smem:[#allocation7 + $0x15]]
    %v306 = vstv %s305
    %v307 = vmul.f32 %v71, %v306
    %s308 = sld [smem:[#allocation8 + $0x15]]
    %v309 = vstv %s308
    %v310 = vadd.f32 %v307, %v309
    %v311 = vmax.f32 %v310, 0.0
    %s312 = sld [smem:[#allocation10 + $0x15]]
    %v313 = vstv %s312
    %v314 = vmul.f32 %v311, %v313
    %v315 = vadd.f32 %v304, %v314
    %s316 = sld [smem:[#allocation7 + $0x16]]
    %v317 = vstv %s316
    %v318 = vmul.f32 %v71, %v317
    %s319 = sld [smem:[#allocation8 + $0x16]]
    %v320 = vstv %s319
    %v321 = vadd.f32 %v318, %v320
    %v322 = vmax.f32 %v321, 0.0
    %s323 = sld [smem:[#allocation10 + $0x16]]
    %v324 = vstv %s323
    %v325 = vmul.f32 %v322, %v324
    %v326 = vadd.f32 %v315, %v325
    %s327 = sld [smem:[#allocation7 + $0x17]]
    %v328 = vstv %s327
    %v329 = vmul.f32 %v71, %v328
    %s330 = sld [smem:[#allocation8 + $0x17]]
    %v331 = vstv %s330
    %v332 = vadd.f32 %v329, %v331
    %v333 = vmax.f32 %v332, 0.0
    %s334 = sld [smem:[#allocation10 + $0x17]]
    %v335 = vstv %s334
    %v336 = vmul.f32 %v333, %v335
    %v337 = vadd.f32 %v326, %v336
    %s338 = sld [smem:[#allocation7 + $0x18]]
    %v339 = vstv %s338
    %v340 = vmul.f32 %v71, %v339
    %s341 = sld [smem:[#allocation8 + $0x18]]
    %v342 = vstv %s341
    %v343 = vadd.f32 %v340, %v342
    %v344 = vmax.f32 %v343, 0.0
    %s345 = sld [smem:[#allocation10 + $0x18]]
    %v346 = vstv %s345
    %v347 = vmul.f32 %v344, %v346
    %v348 = vadd.f32 %v337, %v347
    %s349 = sld [smem:[#allocation7 + $0x19]]
    %v350 = vstv %s349
    %v351 = vmul.f32 %v71, %v350
    %s352 = sld [smem:[#allocation8 + $0x19]]
    %v353 = vstv %s352
    %v354 = vadd.f32 %v351, %v353
    %v355 = vmax.f32 %v354, 0.0
    %s356 = sld [smem:[#allocation10 + $0x19]]
    %v357 = vstv %s356
    %v358 = vmul.f32 %v355, %v357
    %v359 = vadd.f32 %v348, %v358
    %s360 = sld [smem:[#allocation7 + $0x1a]]
    %v361 = vstv %s360
    %v362 = vmul.f32 %v71, %v361
    %s363 = sld [smem:[#allocation8 + $0x1a]]
    %v364 = vstv %s363
    %v365 = vadd.f32 %v362, %v364
    %v366 = vmax.f32 %v365, 0.0
    %s367 = sld [smem:[#allocation10 + $0x1a]]
    %v368 = vstv %s367
    %v369 = vmul.f32 %v366, %v368
    %v370 = vadd.f32 %v359, %v369
    %s371 = sld [smem:[#allocation7 + $0x1b]]
    %v372 = vstv %s371
    %v373 = vmul.f32 %v71, %v372
    %s374 = sld [smem:[#allocation8 + $0x1b]]
    %v375 = vstv %s374
    %v376 = vadd.f32 %v373, %v375
    %v377 = vmax.f32 %v376, 0.0
    %s378 = sld [smem:[#allocation10 + $0x1b]]
    %v379 = vstv %s378
    %v380 = vmul.f32 %v377, %v379
    %v381 = vadd.f32 %v370, %v380
    %s382 = sld [smem:[#allocation7 + $0x1c]]
    %v383 = vstv %s382
    %v384 = vmul.f32 %v71, %v383
    %s385 = sld [smem:[#allocation8 + $0x1c]]
    %v386 = vstv %s385
    %v387 = vadd.f32 %v384, %v386
    %v388 = vmax.f32 %v387, 0.0
    %s389 = sld [smem:[#allocation10 + $0x1c]]
    %v390 = vstv %s389
    %v391 = vmul.f32 %v388, %v390
    %v392 = vadd.f32 %v381, %v391
    %s393 = sld [smem:[#allocation7 + $0x1d]]
    %v394 = vstv %s393
    %v395 = vmul.f32 %v71, %v394
    %s396 = sld [smem:[#allocation8 + $0x1d]]
    %v397 = vstv %s396
    %v398 = vadd.f32 %v395, %v397
    %v399 = vmax.f32 %v398, 0.0
    %s400 = sld [smem:[#allocation10 + $0x1d]]
    %v401 = vstv %s400
    %v402 = vmul.f32 %v399, %v401
    %v403 = vadd.f32 %v392, %v402
    %s404 = sld [smem:[#allocation7 + $0x1e]]
    %v405 = vstv %s404
    %v406 = vmul.f32 %v71, %v405
    %s407 = sld [smem:[#allocation8 + $0x1e]]
    %v408 = vstv %s407
    %v409 = vadd.f32 %v406, %v408
    %v410 = vmax.f32 %v409, 0.0
    %s411 = sld [smem:[#allocation10 + $0x1e]]
    %v412 = vstv %s411
    %v413 = vmul.f32 %v410, %v412
    %v414 = vadd.f32 %v403, %v413
    %s415 = sld [smem:[#allocation7 + $0x1f]]
    %v416 = vstv %s415
    %v417 = vmul.f32 %v71, %v416
    %s418 = sld [smem:[#allocation8 + $0x1f]]
    %v419 = vstv %s418
    %v420 = vadd.f32 %v417, %v419
    %v421 = vmax.f32 %v420, 0.0
    %s422 = sld [smem:[#allocation10 + $0x1f]]
    %v423 = vstv %s422
    %v424 = vmul.f32 %v421, %v423
    %v425 = vadd.f32 %v414, %v424
    %s426 = sld [smem:[#allocation7 + $0x20]]
    %v427 = vstv %s426
    %v428 = vmul.f32 %v71, %v427
    %s429 = sld [smem:[#allocation8 + $0x20]]
    %v430 = vstv %s429
    %v431 = vadd.f32 %v428, %v430
    %v432 = vmax.f32 %v431, 0.0
    %s433 = sld [smem:[#allocation10 + $0x20]]
    %v434 = vstv %s433
    %v435 = vmul.f32 %v432, %v434
    %v436 = vadd.f32 %v425, %v435
    %s437 = sld [smem:[#allocation7 + $0x21]]
    %v438 = vstv %s437
    %v439 = vmul.f32 %v71, %v438
    %s440 = sld [smem:[#allocation8 + $0x21]]
    %v441 = vstv %s440
    %v442 = vadd.f32 %v439, %v441
    %v443 = vmax.f32 %v442, 0.0
    %s444 = sld [smem:[#allocation10 + $0x21]]
    %v445 = vstv %s444
    %v446 = vmul.f32 %v443, %v445
    %v447 = vadd.f32 %v436, %v446
    %s448 = sld [smem:[#allocation7 + $0x22]]
    %v449 = vstv %s448
    %v450 = vmul.f32 %v71, %v449
    %s451 = sld [smem:[#allocation8 + $0x22]]
    %v452 = vstv %s451
    %v453 = vadd.f32 %v450, %v452
    %v454 = vmax.f32 %v453, 0.0
    %s455 = sld [smem:[#allocation10 + $0x22]]
    %v456 = vstv %s455
    %v457 = vmul.f32 %v454, %v456
    %v458 = vadd.f32 %v447, %v457
    %s459 = sld [smem:[#allocation7 + $0x23]]
    %v460 = vstv %s459
    %v461 = vmul.f32 %v71, %v460
    %s462 = sld [smem:[#allocation8 + $0x23]]
    %v463 = vstv %s462
    %v464 = vadd.f32 %v461, %v463
    %v465 = vmax.f32 %v464, 0.0
    %s466 = sld [smem:[#allocation10 + $0x23]]
    %v467 = vstv %s466
    %v468 = vmul.f32 %v465, %v467
    %v469 = vadd.f32 %v458, %v468
    %s470 = sld [smem:[#allocation7 + $0x24]]
    %v471 = vstv %s470
    %v472 = vmul.f32 %v71, %v471
    %s473 = sld [smem:[#allocation8 + $0x24]]
    %v474 = vstv %s473
    %v475 = vadd.f32 %v472, %v474
    %v476 = vmax.f32 %v475, 0.0
    %s477 = sld [smem:[#allocation10 + $0x24]]
    %v478 = vstv %s477
    %v479 = vmul.f32 %v476, %v478
    %v480 = vadd.f32 %v469, %v479
    %s481 = sld [smem:[#allocation7 + $0x25]]
    %v482 = vstv %s481
    %v483 = vmul.f32 %v71, %v482
    %s484 = sld [smem:[#allocation8 + $0x25]]
    %v485 = vstv %s484
    %v486 = vadd.f32 %v483, %v485
    %v487 = vmax.f32 %v486, 0.0
    %s488 = sld [smem:[#allocation10 + $0x25]]
    %v489 = vstv %s488
    %v490 = vmul.f32 %v487, %v489
    %v491 = vadd.f32 %v480, %v490
    %s492 = sld [smem:[#allocation7 + $0x26]]
    %v493 = vstv %s492
    %v494 = vmul.f32 %v71, %v493
    %s495 = sld [smem:[#allocation8 + $0x26]]
    %v496 = vstv %s495
    %v497 = vadd.f32 %v494, %v496
    %v498 = vmax.f32 %v497, 0.0
    %s499 = sld [smem:[#allocation10 + $0x26]]
    %v500 = vstv %s499
    %v501 = vmul.f32 %v498, %v500
    %v502 = vadd.f32 %v491, %v501
    %s503 = sld [smem:[#allocation7 + $0x27]]
    %v504 = vstv %s503
    %v505 = vmul.f32 %v71, %v504
    %s506 = sld [smem:[#allocation8 + $0x27]]
    %v507 = vstv %s506
    %v508 = vadd.f32 %v505, %v507
    %v509 = vmax.f32 %v508, 0.0
    %s510 = sld [smem:[#allocation10 + $0x27]]
    %v511 = vstv %s510
    %v512 = vmul.f32 %v509, %v511
    %v513 = vadd.f32 %v502, %v512
    %s514 = sld [smem:[#allocation7 + $0x28]]
    %v515 = vstv %s514
    %v516 = vmul.f32 %v71, %v515
    %s517 = sld [smem:[#allocation8 + $0x28]]
    %v518 = vstv %s517
    %v519 = vadd.f32 %v516, %v518
    %v520 = vmax.f32 %v519, 0.0
    %s521 = sld [smem:[#allocation10 + $0x28]]
    %v522 = vstv %s521
    %v523 = vmul.f32 %v520, %v522
    %v524 = vadd.f32 %v513, %v523
    %s525 = sld [smem:[#allocation7 + $0x29]]
    %v526 = vstv %s525
    %v527 = vmul.f32 %v71, %v526
    %s528 = sld [smem:[#allocation8 + $0x29]]
    %v529 = vstv %s528
    %v530 = vadd.f32 %v527, %v529
    %v531 = vmax.f32 %v530, 0.0
    %s532 = sld [smem:[#allocation10 + $0x29]]
    %v533 = vstv %s532
    %v534 = vmul.f32 %v531, %v533
    %v535 = vadd.f32 %v524, %v534
    %s536 = sld [smem:[#allocation7 + $0x2a]]
    %v537 = vstv %s536
    %v538 = vmul.f32 %v71, %v537
    %s539 = sld [smem:[#allocation8 + $0x2a]]
    %v540 = vstv %s539
    %v541 = vadd.f32 %v538, %v540
    %v542 = vmax.f32 %v541, 0.0
    %s543 = sld [smem:[#allocation10 + $0x2a]]
    %v544 = vstv %s543
    %v545 = vmul.f32 %v542, %v544
    %v546 = vadd.f32 %v535, %v545
    %s547 = sld [smem:[#allocation7 + $0x2b]]
    %v548 = vstv %s547
    %v549 = vmul.f32 %v71, %v548
    %s550 = sld [smem:[#allocation8 + $0x2b]]
    %v551 = vstv %s550
    %v552 = vadd.f32 %v549, %v551
    %v553 = vmax.f32 %v552, 0.0
    %s554 = sld [smem:[#allocation10 + $0x2b]]
    %v555 = vstv %s554
    %v556 = vmul.f32 %v553, %v555
    %v557 = vadd.f32 %v546, %v556
    %s558 = sld [smem:[#allocation7 + $0x2c]]
    %v559 = vstv %s558
    %v560 = vmul.f32 %v71, %v559
    %s561 = sld [smem:[#allocation8 + $0x2c]]
    %v562 = vstv %s561
    %v563 = vadd.f32 %v560, %v562
    %v564 = vmax.f32 %v563, 0.0
    %s565 = sld [smem:[#allocation10 + $0x2c]]
    %v566 = vstv %s565
    %v567 = vmul.f32 %v564, %v566
    %v568 = vadd.f32 %v557, %v567
    %s569 = sld [smem:[#allocation7 + $0x2d]]
    %v570 = vstv %s569
    %v571 = vmul.f32 %v71, %v570
    %s572 = sld [smem:[#allocation8 + $0x2d]]
    %v573 = vstv %s572
    %v574 = vadd.f32 %v571, %v573
    %v575 = vmax.f32 %v574, 0.0
    %s576 = sld [smem:[#allocation10 + $0x2d]]
    %v577 = vstv %s576
    %v578 = vmul.f32 %v575, %v577
    %v579 = vadd.f32 %v568, %v578
    %s580 = sld [smem:[#allocation7 + $0x2e]]
    %v581 = vstv %s580
    %v582 = vmul.f32 %v71, %v581
    %s583 = sld [smem:[#allocation8 + $0x2e]]
    %v584 = vstv %s583
    %v585 = vadd.f32 %v582, %v584
    %v586 = vmax.f32 %v585, 0.0
    %s587 = sld [smem:[#allocation10 + $0x2e]]
    %v588 = vstv %s587
    %v589 = vmul.f32 %v586, %v588
    %v590 = vadd.f32 %v579, %v589
    %s591 = sld [smem:[#allocation7 + $0x2f]]
    %v592 = vstv %s591
    %v593 = vmul.f32 %v71, %v592
    %s594 = sld [smem:[#allocation8 + $0x2f]]
    %v595 = vstv %s594
    %v596 = vadd.f32 %v593, %v595
    %v597 = vmax.f32 %v596, 0.0
    %s598 = sld [smem:[#allocation10 + $0x2f]]
    %v599 = vstv %s598
    %v600 = vmul.f32 %v597, %v599
    %v601 = vadd.f32 %v590, %v600
    %s602 = sld [smem:[#allocation7 + $0x30]]
    %v603 = vstv %s602
    %v604 = vmul.f32 %v71, %v603
    %s605 = sld [smem:[#allocation8 + $0x30]]
    %v606 = vstv %s605
    %v607 = vadd.f32 %v604, %v606
    %v608 = vmax.f32 %v607, 0.0
    %s609 = sld [smem:[#allocation10 + $0x30]]
    %v610 = vstv %s609
    %v611 = vmul.f32 %v608, %v610
    %v612 = vadd.f32 %v601, %v611
    %s613 = sld [smem:[#allocation7 + $0x31]]
    %v614 = vstv %s613
    %v615 = vmul.f32 %v71, %v614
    %s616 = sld [smem:[#allocation8 + $0x31]]
    %v617 = vstv %s616
    %v618 = vadd.f32 %v615, %v617
    %v619 = vmax.f32 %v618, 0.0
    %s620 = sld [smem:[#allocation10 + $0x31]]
    %v621 = vstv %s620
    %v622 = vmul.f32 %v619, %v621
    %v623 = vadd.f32 %v612, %v622
    %624 = vst [vmem:[#allocation11] sm:$0xff] %v623
    // Predicated region
    $region38: #{tpu_custom_call.1} parent=1 // pred_check
      _
    $region39: #{tpu_custom_call.1} parent=1 // pred_check_branch
      %626 = sbr.rel (0) target = $region41
    $region40: #{tpu_custom_call.1} parent=1 // pred_region
      %s628 = ssub.s32 128, 128
      %629 = vsyncadd [#allocation5], %s628
      %s631 = sshll.u32 [#allocation11], 4
      %s632 = int_to_ptr.vmem [resolvable:$true] %s631
      %634 = dma.vmem_to_hbm [thread:$0]  %s632, 128, %s5, [#allocation5]
    $region41: #{tpu_custom_call.1} parent=1 // pred_fallthru
      _
    // Predicated region
    $region42: #{tpu_custom_call.1} parent=1 // pred_check
      _
    $region43: #{tpu_custom_call.1} parent=1 // pred_check_branch
      %636 = sbr.rel (0) target = $region45
    $region44: #{tpu_custom_call.1} parent=1 // pred_region
      %637 = dma.done [#allocation5], 128
    $region45: #{tpu_custom_call.1} parent=1 // pred_fallthru
      _
    %638 = vsyncpa [#allocation4], 1
    %639 = vsyncpa [#allocation5], 1
    %640 = vsyncpa [#allocation6], 1
    %641 = vsyncpa [#allocation9], 1

</llo_original>
